<compile_context>
chip_gen: v7x
topology: tpu7x:2x2x1
jax: 0.10.0
libtpu: 0.0.40
codegen_flags: <defaults>
</compile_context>

<pallas_src>
import jax
import jax.numpy as jnp
from jax import lax
from jax.experimental import pallas as pl
from jax.experimental.pallas import tpu as pltpu


def lstm_dropout_kernel(x_ref, wih0_ref, b0_ref, wbig_ref, b1_ref,
                        wlin_ref, blin_ref, out_ref, g0_scr):
    # x_ref is time-major, batch-padded and flattened: (T*B, F), bf16.
    TB, _ = x_ref.shape
    B = out_ref.shape[0]
    T = TB // B
    H = wbig_ref.shape[0] // 2
    G = 4 * H

    # ---- hoisted layer-0 input projection (BN + 0.5 gate pre-scale folded) ----
    g0_scr[...] = (jnp.dot(x_ref[...], wih0_ref[...],
                           preferred_element_type=jnp.float32)
                   + b0_ref[...])                              # (T*B, 4H) f32

    # Small weights: fine to pin in vregs at H=32.
    # TODO(synk): for production H, pass the refs to the dots instead of
    # pre-loading (avoid vreg-file pressure across the unrolled loop).
    wbig = wbig_ref[...]                                       # (2H, 8H) bf16
    b1b = jnp.broadcast_to(b1_ref[...], (B, G))                # hoisted broadcast

    # Lane mask selecting the "g" gate (lanes [2H, 3H)) of a (B, 4H) vreg.
    lane = lax.broadcasted_iota(jnp.int32, (B, G), 1)
    g_mask = (lane >= 2 * H) & (lane < 3 * H)

    def gate_update(gates, c):
        # i/f/o pre-activations were pre-scaled by 0.5 in the wrapper, so
        # sigmoid(z) = 0.5*tanh(z/2) + 0.5 needs only the tanh already computed
        # for the g gate -> 2 EUP pushes per cell total.
        t = jnp.tanh(gates)
        act = jnp.where(g_mask, t, 0.5 * t + 0.5)
        i = act[:, 0 * H:1 * H]
        f = act[:, 1 * H:2 * H]
        g = act[:, 2 * H:3 * H]
        o = act[:, 3 * H:4 * H]
        c_new = f * c + i * g
        h_new = o * jnp.tanh(c_new)
        return h_new, c_new

    def packed_gates(h0, h1):
        # Single MXU pass: [h0 | h1] @ [[whh0, wih1], [0, whh1]]
        #   -> [:, :G] = h0 @ whh0        (layer-0 recurrent term)
        #   -> [:, G:] = h0 @ wih1 + h1 @ whh1  (layer-1 term)
        hcat = jnp.concatenate([h0, h1], axis=1).astype(jnp.bfloat16)
        return jnp.dot(hcat, wbig, preferred_element_type=jnp.float32)

    zeros = jnp.zeros((B, H), jnp.float32)

    # ---- wavefront-interleaved recurrence ----
    # layer-0 at time 0 (h0 = 0 so the recurrent term vanishes).
    h0, c0 = gate_update(g0_scr[pl.ds(0, B), :], zeros)

    def body(t, carry):
        h0, c0, h1, c1 = carry
        big = packed_gates(h0, h1)                 # one MXU pass per step
        row = pl.multiple_of(t * B, 8)             # B padded to 8 -> aligned slice
        gates0 = g0_scr[pl.ds(row, B), :] + big[:, :G]   # layer-0 at time t
        gates1 = big[:, G:] + b1b                        # layer-1 at time t-1
        h1n, c1n = gate_update(gates1, c1)
        h0n, c0n = gate_update(gates0, c0)
        return (h0n, c0n, h1n, c1n)

    # TODO(synk): bound the unroll (e.g. unroll=4) for production T.
    h0, c0, h1, c1 = lax.fori_loop(1, T, body, (h0, c0, zeros, zeros),
                                   unroll=True)

    # TODO(synk): inter-layer dropout (p=0.2) is identity in eval mode; the
    # training-mode Bernoulli mask (PyTorch RNG) is not reproduced here.
    big = packed_gates(h0, h1)
    h_last, _ = gate_update(big[:, G:] + b1b, c1)  # layer-1 at time T-1

    # ---- Linear head on the last hidden state (lane-padded output) ----
    out_ref[...] = (jnp.dot(h_last.astype(jnp.bfloat16), wlin_ref[...],
                            preferred_element_type=jnp.float32)
                    + blin_ref[...])


def lstm_dropout_forward(x, p):
    B, T, F = x.shape
    H = p["whh0"].shape[0]
    O = p["wlin"].shape[1]
    G = 4 * H
    LANE, SUB = 128, 8
    o_pad = ((O + LANE - 1) // LANE) * LANE
    b_pad = ((B + SUB - 1) // SUB) * SUB
    eps = 1e-5

    # Fold eval-mode BatchNorm1d into the layer-0 input weight / bias.
    scale = p["gamma"] * lax.rsqrt(p["var"] + eps)           # (1, F)
    shift = p["beta"] - p["mean"] * scale                    # (1, F)
    wih0 = p["wih0"] * scale.reshape(F, 1)                   # (F, 4H)
    b0 = p["b0"] + shift @ p["wih0"]                         # (1, 4H)

    # sigmoid(z) = 0.5*tanh(z/2) + 0.5  ->  pre-scale every contribution to the
    # i/f/o gate pre-activations by 0.5 (g gate columns left untouched).
    gs = jnp.concatenate([jnp.full((1, H), 0.5, jnp.float32),
                          jnp.full((1, H), 0.5, jnp.float32),
                          jnp.ones((1, H), jnp.float32),
                          jnp.full((1, H), 0.5, jnp.float32)], axis=1)  # (1, 4H)
    wih0 = wih0 * gs
    b0 = b0 * gs
    whh0 = p["whh0"] * gs
    wih1 = p["wih1"] * gs
    whh1 = p["whh1"] * gs
    b1 = p["b1"] * gs

    # Packed recurrent weight for the single per-step MXU pass.
    wbig = jnp.concatenate(
        [jnp.concatenate([whh0, wih1], axis=1),
         jnp.concatenate([jnp.zeros((H, G), jnp.float32), whh1], axis=1)],
        axis=0)                                              # (2H, 8H)

    # Lane-dense Linear head: pad (H, O) -> (H, 128k); slice outside the kernel.
    wlin = jnp.zeros((H, o_pad), jnp.float32).at[:, :O].set(p["wlin"])
    blin = jnp.zeros((1, o_pad), jnp.float32).at[:, :O].set(p["blin"])

    # Time-major, batch padded to a sublane multiple, flattened input: the
    # hoisted projection is one 2-D matmul and per-step gate reads are
    # tile-aligned contiguous row blocks.
    x_tm = jnp.transpose(x, (1, 0, 2))                       # (T, B, F)
    x_tm = jnp.pad(x_tm, ((0, 0), (0, b_pad - B), (0, 0)))
    x_tm = x_tm.reshape(T * b_pad, F)

    bf16 = lambda a: a.astype(jnp.bfloat16)   # MXU operands; accum stays f32

    # TODO(synk): for production shapes add a batch-tiled grid with
    # dimension_semantics=("parallel",) (v7x megacore), time-chunk the hoisted
    # g0_scr scratch (or store it bf16) for v7x's 64 MiB VMEM, and set
    # vmem_limit_bytes explicitly; unnecessary at these toy sizes.
    vmem = pl.BlockSpec(memory_space=pltpu.MemorySpace.VMEM)
    out = pl.pallas_call(
        lstm_dropout_kernel,
        out_shape=jax.ShapeDtypeStruct((b_pad, o_pad), jnp.float32),
        in_specs=[vmem] * 7,
        out_specs=vmem,
        scratch_shapes=[pltpu.VMEM((T * b_pad, G), jnp.float32)],  # hoisted gates
    )(bf16(x_tm), bf16(wih0), b0, bf16(wbig), b1, bf16(wlin), blin)
    return out[:B, :O]


def init_params(key, input_size, hidden_size, output_size):
    """Deterministic synthetic init matching the PyTorch module's shapes."""
    F, H, O = input_size, hidden_size, output_size
    ks = jax.random.split(key, 14)
    stdv = 1.0 / jnp.sqrt(jnp.float32(H))

    def u(k, shape):
        return jax.random.uniform(k, shape, jnp.float32, -stdv, stdv)

    # nn.LSTM: weight_ih_l0 (4H,F), weight_hh_l0 (4H,H), biases (4H,) x2 per layer
    w_ih_l0 = u(ks[0], (4 * H, F)); w_hh_l0 = u(ks[1], (4 * H, H))
    b_ih_l0 = u(ks[2], (4 * H,));   b_hh_l0 = u(ks[3], (4 * H,))
    w_ih_l1 = u(ks[4], (4 * H, H)); w_hh_l1 = u(ks[5], (4 * H, H))
    b_ih_l1 = u(ks[6], (4 * H,));   b_hh_l1 = u(ks[7], (4 * H,))
    # nn.Linear: weight (O,H), bias (O,)
    w_lin = u(ks[8], (O, H));       b_lin = u(ks[9], (O,))
    # nn.BatchNorm1d(F): affine params + running stats (eval-mode forward)
    gamma = jax.random.uniform(ks[10], (F,), jnp.float32, 0.5, 1.5)
    beta = jax.random.uniform(ks[11], (F,), jnp.float32, -0.5, 0.5)
    mean = jax.random.uniform(ks[12], (F,), jnp.float32, -0.3, 0.3)
    var = jax.random.uniform(ks[13], (F,), jnp.float32, 0.5, 1.5)

    return dict(
        gamma=gamma.reshape(1, F), beta=beta.reshape(1, F),
        mean=mean.reshape(1, F), var=var.reshape(1, F),
        wih0=w_ih_l0.T, whh0=w_hh_l0.T, b0=(b_ih_l0 + b_hh_l0).reshape(1, 4 * H),
        wih1=w_ih_l1.T, whh1=w_hh_l1.T, b1=(b_ih_l1 + b_hh_l1).reshape(1, 4 * H),
        wlin=w_lin.T, blin=b_lin.reshape(1, O),
    )


def reference_forward(x, p):
    """Pure-JAX f32 reference mirroring the PyTorch forward (eval mode)."""
    B, T, F = x.shape
    H = p["whh0"].shape[0]
    eps = 1e-5
    xn = (x - p["mean"]) * lax.rsqrt(p["var"] + eps) * p["gamma"] + p["beta"]

    def cell(x_t, h, c, wih, whh, b):
        g = x_t @ wih + h @ whh + b
        i = jax.nn.sigmoid(g[:, 0 * H:1 * H])
        f = jax.nn.sigmoid(g[:, 1 * H:2 * H])
        gg = jnp.tanh(g[:, 2 * H:3 * H])
        o = jax.nn.sigmoid(g[:, 3 * H:4 * H])
        c = f * c + i * gg
        return o * jnp.tanh(c), c

    h0 = c0 = jnp.zeros((B, H), jnp.float32)
    seq = []
    h, c = h0, c0
    for t in range(T):
        h, c = cell(xn[:, t, :], h, c, p["wih0"], p["whh0"], p["b0"])
        seq.append(h)
    h, c = h0, c0
    for t in range(T):
        h, c = cell(seq[t], h, c, p["wih1"], p["whh1"], p["b1"])
    return h @ p["wlin"] + p["blin"]


if __name__ == "__main__":
    B, T, F, H, O = 2, 8, 4, 32, 3   # batch, seq, input_size, hidden_size, output_size
    key = jax.random.PRNGKey(0)
    kx, kp = jax.random.split(key)
    x = jax.random.normal(kx, (B, T, F), jnp.float32)
    params = init_params(kp, F, H, O)

    out = jax.block_until_ready(lstm_dropout_forward(x, params))
    ref = reference_forward(x, params)

    assert out.shape == (B, O), out.shape
    # bf16 MXU operands (f32 accumulation) cost ~3 decimal digits on the gate
    # pre-activations and compound over the T-step recurrence; 2e-2 still
    # catches structural / gate-scaling bugs, which produce O(1e-1) errors.
    assert jnp.allclose(out, ref, atol=2e-2, rtol=2e-2), (out, ref)
    print("KERNEL_OK")
</pallas_src>

<mosaic_0001>
module attributes {stable_mosaic.version = 11 : i64} {
  func.func @lstm_dropout_kernel(%arg0: memref<64x4xbf16, #tpu.memory_space<vmem>>, %arg1: memref<4x128xbf16, #tpu.memory_space<vmem>>, %arg2: memref<1x128xf32, #tpu.memory_space<vmem>>, %arg3: memref<64x256xbf16, #tpu.memory_space<vmem>>, %arg4: memref<1x128xf32, #tpu.memory_space<vmem>>, %arg5: memref<32x128xbf16, #tpu.memory_space<vmem>>, %arg6: memref<1x128xf32, #tpu.memory_space<vmem>>, %arg7: memref<8x128xf32, #tpu.memory_space<vmem>>, %arg8: memref<64x128xf32, #tpu.memory_space<vmem>>) attributes {dimension_semantics = [], scalar_prefetch = 0 : i64, scratch_operands = 1 : i64, tpu.core_type = #tpu.core_type<tc>} {
    %c0 = arith.constant 0 : index
    %c0_0 = arith.constant 0 : index
    %0 = vector.load %arg0[%c0, %c0_0] : memref<64x4xbf16, #tpu.memory_space<vmem>>, vector<64x4xbf16>
    %c0_1 = arith.constant 0 : index
    %c0_2 = arith.constant 0 : index
    %1 = vector.load %arg1[%c0_1, %c0_2] : memref<4x128xbf16, #tpu.memory_space<vmem>>, vector<4x128xbf16>
    %cst = arith.constant dense<0.000000e+00> : vector<64x128xf32>
    %2 = tpu.matmul %0, %1, %cst {dimension_numbers = #tpu.dot_dimension_numbers<[1], [0], [0], [1], [0, 0, 1, 1], [], []>} : vector<64x4xbf16>, vector<4x128xbf16>, vector<64x128xf32> -> vector<64x128xf32>
    %c0_3 = arith.constant 0 : index
    %c0_4 = arith.constant 0 : index
    %3 = vector.load %arg2[%c0_3, %c0_4] : memref<1x128xf32, #tpu.memory_space<vmem>>, vector<1x128xf32>
    %4 = vector.broadcast %3 : vector<1x128xf32> to vector<64x128xf32>
    %5 = arith.addf %2, %4 : vector<64x128xf32>
    %c0_5 = arith.constant 0 : index
    %c0_6 = arith.constant 0 : index
    %6 = vector.load %arg8[%c0_5, %c0_6] : memref<64x128xf32, #tpu.memory_space<vmem>>, vector<64x128xf32>
    tpu.vector_store %arg8[%c0_5, %c0_6], %5 {strides = array<i32>} : memref<64x128xf32, #tpu.memory_space<vmem>>, vector<64x128xf32>,
    %c0_7 = arith.constant 0 : index
    %c0_8 = arith.constant 0 : index
    %7 = vector.load %arg3[%c0_7, %c0_8] : memref<64x256xbf16, #tpu.memory_space<vmem>>, vector<64x256xbf16>
    %c0_9 = arith.constant 0 : index
    %c0_10 = arith.constant 0 : index
    %8 = vector.load %arg4[%c0_9, %c0_10] : memref<1x128xf32, #tpu.memory_space<vmem>>, vector<1x128xf32>
    %9 = vector.shape_cast %8 : vector<1x128xf32> to vector<1x128xf32>
    %10 = vector.broadcast %9 : vector<1x128xf32> to vector<8x128xf32>
    %11 = tpu.iota {dimensions = array<i32: 1>} : vector<8x128xi32>
    %c64_i32 = arith.constant 64 : i32
    %12 = vector.broadcast %c64_i32 : i32 to vector<8x128xi32>
    %13 = arith.cmpi sge, %11, %12 : vector<8x128xi32>
    %c96_i32 = arith.constant 96 : i32
    %14 = vector.broadcast %c96_i32 : i32 to vector<8x128xi32>
    %15 = arith.cmpi slt, %11, %14 : vector<8x128xi32>
    %16 = arith.andi %13, %15 : vector<8x128xi1>
    %cst_11 = arith.constant 0.000000e+00 : f32
    %17 = vector.broadcast %cst_11 : f32 to vector<8x32xf32>
    %c0_12 = arith.constant 0 : index
    %c0_13 = arith.constant 0 : index
    %18 = vector.load %arg8[%c0_12, %c0_13] : memref<64x128xf32, #tpu.memory_space<vmem>>, vector<8x128xf32>
    %19 = math.tanh %18 : vector<8x128xf32>
    %cst_14 = arith.constant 5.000000e-01 : f32
    %20 = vector.broadcast %cst_14 : f32 to vector<8x128xf32>
    %21 = arith.mulf %20, %19 : vector<8x128xf32>
    %cst_15 = arith.constant 5.000000e-01 : f32
    %22 = vector.broadcast %cst_15 : f32 to vector<8x128xf32>
    %23 = arith.addf %21, %22 : vector<8x128xf32>
    %24 = arith.select %16, %19, %23 : vector<8x128xi1>, vector<8x128xf32>
    %25 = vector.extract_strided_slice %24 {offsets = [0, 0], sizes = [8, 32], strides = [1, 1]} : vector<8x128xf32> to vector<8x32xf32>
    %26 = vector.extract_strided_slice %24 {offsets = [0, 32], sizes = [8, 32], strides = [1, 1]} : vector<8x128xf32> to vector<8x32xf32>
    %27 = vector.extract_strided_slice %24 {offsets = [0, 64], sizes = [8, 32], strides = [1, 1]} : vector<8x128xf32> to vector<8x32xf32>
    %28 = vector.extract_strided_slice %24 {offsets = [0, 96], sizes = [8, 32], strides = [1, 1]} : vector<8x128xf32> to vector<8x32xf32>
    %29 = arith.mulf %26, %17 : vector<8x32xf32>
    %30 = arith.mulf %25, %27 : vector<8x32xf32>
    %31 = arith.addf %29, %30 : vector<8x32xf32>
    %32 = math.tanh %31 : vector<8x32xf32>
    %33 = arith.mulf %28, %32 : vector<8x32xf32>
    %c1_i32 = arith.constant 1 : i32
    %34 = tpu.concatenate %33, %17 in 1 : vector<8x32xf32>, vector<8x32xf32> -> vector<8x64xf32>
    %35 = arith.truncf %34 : vector<8x64xf32> to vector<8x64xbf16>
    %cst_16 = arith.constant dense<0.000000e+00> : vector<8x256xf32>
    %36 = tpu.matmul %35, %7, %cst_16 {dimension_numbers = #tpu.dot_dimension_numbers<[1], [0], [0], [1], [0, 0, 1, 1], [], []>} : vector<8x64xbf16>, vector<64x256xbf16>, vector<8x256xf32> -> vector<8x256xf32>
    %c8_i32 = arith.constant 8 : i32
    %37 = arith.muli %c1_i32, %c8_i32 : i32
    %38 = tpu.assume_multiple %37, 8 : i32
    %39 = arith.index_cast %38 : i32 to index
    %c0_17 = arith.constant 0 : index
    %40 = vector.load %arg8[%39, %c0_17] : memref<64x128xf32, #tpu.memory_space<vmem>>, vector<8x128xf32>
    %41 = vector.extract_strided_slice %36 {offsets = [0, 0], sizes = [8, 128], strides = [1, 1]} : vector<8x256xf32> to vector<8x128xf32>
    %42 = arith.addf %40, %41 : vector<8x128xf32>
    %43 = vector.extract_strided_slice %36 {offsets = [0, 128], sizes = [8, 128], strides = [1, 1]} : vector<8x256xf32> to vector<8x128xf32>
    %44 = arith.addf %43, %10 : vector<8x128xf32>
    %45 = math.tanh %44 : vector<8x128xf32>
    %cst_18 = arith.constant 5.000000e-01 : f32
    %46 = vector.broadcast %cst_18 : f32 to vector<8x128xf32>
    %47 = arith.mulf %46, %45 : vector<8x128xf32>
    %cst_19 = arith.constant 5.000000e-01 : f32
    %48 = vector.broadcast %cst_19 : f32 to vector<8x128xf32>
    %49 = arith.addf %47, %48 : vector<8x128xf32>
    %50 = arith.select %16, %45, %49 : vector<8x128xi1>, vector<8x128xf32>
    %51 = vector.extract_strided_slice %50 {offsets = [0, 0], sizes = [8, 32], strides = [1, 1]} : vector<8x128xf32> to vector<8x32xf32>
    %52 = vector.extract_strided_slice %50 {offsets = [0, 32], sizes = [8, 32], strides = [1, 1]} : vector<8x128xf32> to vector<8x32xf32>
    %53 = vector.extract_strided_slice %50 {offsets = [0, 64], sizes = [8, 32], strides = [1, 1]} : vector<8x128xf32> to vector<8x32xf32>
    %54 = vector.extract_strided_slice %50 {offsets = [0, 96], sizes = [8, 32], strides = [1, 1]} : vector<8x128xf32> to vector<8x32xf32>
    %55 = arith.mulf %52, %17 : vector<8x32xf32>
    %56 = arith.mulf %51, %53 : vector<8x32xf32>
    %57 = arith.addf %55, %56 : vector<8x32xf32>
    %58 = math.tanh %57 : vector<8x32xf32>
    %59 = arith.mulf %54, %58 : vector<8x32xf32>
    %60 = math.tanh %42 : vector<8x128xf32>
    %cst_20 = arith.constant 5.000000e-01 : f32
    %61 = vector.broadcast %cst_20 : f32 to vector<8x128xf32>
    %62 = arith.mulf %61, %60 : vector<8x128xf32>
    %cst_21 = arith.constant 5.000000e-01 : f32
    %63 = vector.broadcast %cst_21 : f32 to vector<8x128xf32>
    %64 = arith.addf %62, %63 : vector<8x128xf32>
    %65 = arith.select %16, %60, %64 : vector<8x128xi1>, vector<8x128xf32>
    %66 = vector.extract_strided_slice %65 {offsets = [0, 0], sizes = [8, 32], strides = [1, 1]} : vector<8x128xf32> to vector<8x32xf32>
    %67 = vector.extract_strided_slice %65 {offsets = [0, 32], sizes = [8, 32], strides = [1, 1]} : vector<8x128xf32> to vector<8x32xf32>
    %68 = vector.extract_strided_slice %65 {offsets = [0, 64], sizes = [8, 32], strides = [1, 1]} : vector<8x128xf32> to vector<8x32xf32>
    %69 = vector.extract_strided_slice %65 {offsets = [0, 96], sizes = [8, 32], strides = [1, 1]} : vector<8x128xf32> to vector<8x32xf32>
    %70 = arith.mulf %67, %31 : vector<8x32xf32>
    %71 = arith.mulf %66, %68 : vector<8x32xf32>
    %72 = arith.addf %70, %71 : vector<8x32xf32>
    %73 = math.tanh %72 : vector<8x32xf32>
    %74 = arith.mulf %69, %73 : vector<8x32xf32>
    %c2_i32 = arith.constant 2 : i32
    %75 = tpu.concatenate %74, %59 in 1 : vector<8x32xf32>, vector<8x32xf32> -> vector<8x64xf32>
    %76 = arith.truncf %75 : vector<8x64xf32> to vector<8x64xbf16>
    %cst_22 = arith.constant dense<0.000000e+00> : vector<8x256xf32>
    %77 = tpu.matmul %76, %7, %cst_22 {dimension_numbers = #tpu.dot_dimension_numbers<[1], [0], [0], [1], [0, 0, 1, 1], [], []>} : vector<8x64xbf16>, vector<64x256xbf16>, vector<8x256xf32> -> vector<8x256xf32>
    %c8_i32_23 = arith.constant 8 : i32
    %78 = arith.muli %c2_i32, %c8_i32_23 : i32
    %79 = tpu.assume_multiple %78, 8 : i32
    %80 = arith.index_cast %79 : i32 to index
    %c0_24 = arith.constant 0 : index
    %81 = vector.load %arg8[%80, %c0_24] : memref<64x128xf32, #tpu.memory_space<vmem>>, vector<8x128xf32>
    %82 = vector.extract_strided_slice %77 {offsets = [0, 0], sizes = [8, 128], strides = [1, 1]} : vector<8x256xf32> to vector<8x128xf32>
    %83 = arith.addf %81, %82 : vector<8x128xf32>
    %84 = vector.extract_strided_slice %77 {offsets = [0, 128], sizes = [8, 128], strides = [1, 1]} : vector<8x256xf32> to vector<8x128xf32>
    %85 = arith.addf %84, %10 : vector<8x128xf32>
    %86 = math.tanh %85 : vector<8x128xf32>
    %cst_25 = arith.constant 5.000000e-01 : f32
    %87 = vector.broadcast %cst_25 : f32 to vector<8x128xf32>
    %88 = arith.mulf %87, %86 : vector<8x128xf32>
    %cst_26 = arith.constant 5.000000e-01 : f32
    %89 = vector.broadcast %cst_26 : f32 to vector<8x128xf32>
    %90 = arith.addf %88, %89 : vector<8x128xf32>
    %91 = arith.select %16, %86, %90 : vector<8x128xi1>, vector<8x128xf32>
    %92 = vector.extract_strided_slice %91 {offsets = [0, 0], sizes = [8, 32], strides = [1, 1]} : vector<8x128xf32> to vector<8x32xf32>
    %93 = vector.extract_strided_slice %91 {offsets = [0, 32], sizes = [8, 32], strides = [1, 1]} : vector<8x128xf32> to vector<8x32xf32>
    %94 = vector.extract_strided_slice %91 {offsets = [0, 64], sizes = [8, 32], strides = [1, 1]} : vector<8x128xf32> to vector<8x32xf32>
    %95 = vector.extract_strided_slice %91 {offsets = [0, 96], sizes = [8, 32], strides = [1, 1]} : vector<8x128xf32> to vector<8x32xf32>
    %96 = arith.mulf %93, %57 : vector<8x32xf32>
    %97 = arith.mulf %92, %94 : vector<8x32xf32>
    %98 = arith.addf %96, %97 : vector<8x32xf32>
    %99 = math.tanh %98 : vector<8x32xf32>
    %100 = arith.mulf %95, %99 : vector<8x32xf32>
    %101 = math.tanh %83 : vector<8x128xf32>
    %cst_27 = arith.constant 5.000000e-01 : f32
    %102 = vector.broadcast %cst_27 : f32 to vector<8x128xf32>
    %103 = arith.mulf %102, %101 : vector<8x128xf32>
    %cst_28 = arith.constant 5.000000e-01 : f32
    %104 = vector.broadcast %cst_28 : f32 to vector<8x128xf32>
    %105 = arith.addf %103, %104 : vector<8x128xf32>
    %106 = arith.select %16, %101, %105 : vector<8x128xi1>, vector<8x128xf32>
    %107 = vector.extract_strided_slice %106 {offsets = [0, 0], sizes = [8, 32], strides = [1, 1]} : vector<8x128xf32> to vector<8x32xf32>
    %108 = vector.extract_strided_slice %106 {offsets = [0, 32], sizes = [8, 32], strides = [1, 1]} : vector<8x128xf32> to vector<8x32xf32>
    %109 = vector.extract_strided_slice %106 {offsets = [0, 64], sizes = [8, 32], strides = [1, 1]} : vector<8x128xf32> to vector<8x32xf32>
    %110 = vector.extract_strided_slice %106 {offsets = [0, 96], sizes = [8, 32], strides = [1, 1]} : vector<8x128xf32> to vector<8x32xf32>
    %111 = arith.mulf %108, %72 : vector<8x32xf32>
    %112 = arith.mulf %107, %109 : vector<8x32xf32>
    %113 = arith.addf %111, %112 : vector<8x32xf32>
    %114 = math.tanh %113 : vector<8x32xf32>
    %115 = arith.mulf %110, %114 : vector<8x32xf32>
    %c3_i32 = arith.constant 3 : i32
    %116 = tpu.concatenate %115, %100 in 1 : vector<8x32xf32>, vector<8x32xf32> -> vector<8x64xf32>
    %117 = arith.truncf %116 : vector<8x64xf32> to vector<8x64xbf16>
    %cst_29 = arith.constant dense<0.000000e+00> : vector<8x256xf32>
    %118 = tpu.matmul %117, %7, %cst_29 {dimension_numbers = #tpu.dot_dimension_numbers<[1], [0], [0], [1], [0, 0, 1, 1], [], []>} : vector<8x64xbf16>, vector<64x256xbf16>, vector<8x256xf32> -> vector<8x256xf32>
    %c8_i32_30 = arith.constant 8 : i32
    %119 = arith.muli %c3_i32, %c8_i32_30 : i32
    %120 = tpu.assume_multiple %119, 8 : i32
    %121 = arith.index_cast %120 : i32 to index
    %c0_31 = arith.constant 0 : index
    %122 = vector.load %arg8[%121, %c0_31] : memref<64x128xf32, #tpu.memory_space<vmem>>, vector<8x128xf32>
    %123 = vector.extract_strided_slice %118 {offsets = [0, 0], sizes = [8, 128], strides = [1, 1]} : vector<8x256xf32> to vector<8x128xf32>
    %124 = arith.addf %122, %123 : vector<8x128xf32>
    %125 = vector.extract_strided_slice %118 {offsets = [0, 128], sizes = [8, 128], strides = [1, 1]} : vector<8x256xf32> to vector<8x128xf32>
    %126 = arith.addf %125, %10 : vector<8x128xf32>
    %127 = math.tanh %126 : vector<8x128xf32>
    %cst_32 = arith.constant 5.000000e-01 : f32
    %128 = vector.broadcast %cst_32 : f32 to vector<8x128xf32>
    %129 = arith.mulf %128, %127 : vector<8x128xf32>
    %cst_33 = arith.constant 5.000000e-01 : f32
    %130 = vector.broadcast %cst_33 : f32 to vector<8x128xf32>
    %131 = arith.addf %129, %130 : vector<8x128xf32>
    %132 = arith.select %16, %127, %131 : vector<8x128xi1>, vector<8x128xf32>
    %133 = vector.extract_strided_slice %132 {offsets = [0, 0], sizes = [8, 32], strides = [1, 1]} : vector<8x128xf32> to vector<8x32xf32>
    %134 = vector.extract_strided_slice %132 {offsets = [0, 32], sizes = [8, 32], strides = [1, 1]} : vector<8x128xf32> to vector<8x32xf32>
    %135 = vector.extract_strided_slice %132 {offsets = [0, 64], sizes = [8, 32], strides = [1, 1]} : vector<8x128xf32> to vector<8x32xf32>
    %136 = vector.extract_strided_slice %132 {offsets = [0, 96], sizes = [8, 32], strides = [1, 1]} : vector<8x128xf32> to vector<8x32xf32>
    %137 = arith.mulf %134, %98 : vector<8x32xf32>
    %138 = arith.mulf %133, %135 : vector<8x32xf32>
    %139 = arith.addf %137, %138 : vector<8x32xf32>
    %140 = math.tanh %139 : vector<8x32xf32>
    %141 = arith.mulf %136, %140 : vector<8x32xf32>
    %142 = math.tanh %124 : vector<8x128xf32>
    %cst_34 = arith.constant 5.000000e-01 : f32
    %143 = vector.broadcast %cst_34 : f32 to vector<8x128xf32>
    %144 = arith.mulf %143, %142 : vector<8x128xf32>
    %cst_35 = arith.constant 5.000000e-01 : f32
    %145 = vector.broadcast %cst_35 : f32 to vector<8x128xf32>
    %146 = arith.addf %144, %145 : vector<8x128xf32>
    %147 = arith.select %16, %142, %146 : vector<8x128xi1>, vector<8x128xf32>
    %148 = vector.extract_strided_slice %147 {offsets = [0, 0], sizes = [8, 32], strides = [1, 1]} : vector<8x128xf32> to vector<8x32xf32>
    %149 = vector.extract_strided_slice %147 {offsets = [0, 32], sizes = [8, 32], strides = [1, 1]} : vector<8x128xf32> to vector<8x32xf32>
    %150 = vector.extract_strided_slice %147 {offsets = [0, 64], sizes = [8, 32], strides = [1, 1]} : vector<8x128xf32> to vector<8x32xf32>
    %151 = vector.extract_strided_slice %147 {offsets = [0, 96], sizes = [8, 32], strides = [1, 1]} : vector<8x128xf32> to vector<8x32xf32>
    %152 = arith.mulf %149, %113 : vector<8x32xf32>
    %153 = arith.mulf %148, %150 : vector<8x32xf32>
    %154 = arith.addf %152, %153 : vector<8x32xf32>
    %155 = math.tanh %154 : vector<8x32xf32>
    %156 = arith.mulf %151, %155 : vector<8x32xf32>
    %c4_i32 = arith.constant 4 : i32
    %157 = tpu.concatenate %156, %141 in 1 : vector<8x32xf32>, vector<8x32xf32> -> vector<8x64xf32>
    %158 = arith.truncf %157 : vector<8x64xf32> to vector<8x64xbf16>
    %cst_36 = arith.constant dense<0.000000e+00> : vector<8x256xf32>
    %159 = tpu.matmul %158, %7, %cst_36 {dimension_numbers = #tpu.dot_dimension_numbers<[1], [0], [0], [1], [0, 0, 1, 1], [], []>} : vector<8x64xbf16>, vector<64x256xbf16>, vector<8x256xf32> -> vector<8x256xf32>
    %c8_i32_37 = arith.constant 8 : i32
    %160 = arith.muli %c4_i32, %c8_i32_37 : i32
    %161 = tpu.assume_multiple %160, 8 : i32
    %162 = arith.index_cast %161 : i32 to index
    %c0_38 = arith.constant 0 : index
    %163 = vector.load %arg8[%162, %c0_38] : memref<64x128xf32, #tpu.memory_space<vmem>>, vector<8x128xf32>
    %164 = vector.extract_strided_slice %159 {offsets = [0, 0], sizes = [8, 128], strides = [1, 1]} : vector<8x256xf32> to vector<8x128xf32>
    %165 = arith.addf %163, %164 : vector<8x128xf32>
    %166 = vector.extract_strided_slice %159 {offsets = [0, 128], sizes = [8, 128], strides = [1, 1]} : vector<8x256xf32> to vector<8x128xf32>
    %167 = arith.addf %166, %10 : vector<8x128xf32>
    %168 = math.tanh %167 : vector<8x128xf32>
    %cst_39 = arith.constant 5.000000e-01 : f32
    %169 = vector.broadcast %cst_39 : f32 to vector<8x128xf32>
    %170 = arith.mulf %169, %168 : vector<8x128xf32>
    %cst_40 = arith.constant 5.000000e-01 : f32
    %171 = vector.broadcast %cst_40 : f32 to vector<8x128xf32>
    %172 = arith.addf %170, %171 : vector<8x128xf32>
    %173 = arith.select %16, %168, %172 : vector<8x128xi1>, vector<8x128xf32>
    %174 = vector.extract_strided_slice %173 {offsets = [0, 0], sizes = [8, 32], strides = [1, 1]} : vector<8x128xf32> to vector<8x32xf32>
    %175 = vector.extract_strided_slice %173 {offsets = [0, 32], sizes = [8, 32], strides = [1, 1]} : vector<8x128xf32> to vector<8x32xf32>
    %176 = vector.extract_strided_slice %173 {offsets = [0, 64], sizes = [8, 32], strides = [1, 1]} : vector<8x128xf32> to vector<8x32xf32>
    %177 = vector.extract_strided_slice %173 {offsets = [0, 96], sizes = [8, 32], strides = [1, 1]} : vector<8x128xf32> to vector<8x32xf32>
    %178 = arith.mulf %175, %139 : vector<8x32xf32>
    %179 = arith.mulf %174, %176 : vector<8x32xf32>
    %180 = arith.addf %178, %179 : vector<8x32xf32>
    %181 = math.tanh %180 : vector<8x32xf32>
    %182 = arith.mulf %177, %181 : vector<8x32xf32>
    %183 = math.tanh %165 : vector<8x128xf32>
    %cst_41 = arith.constant 5.000000e-01 : f32
    %184 = vector.broadcast %cst_41 : f32 to vector<8x128xf32>
    %185 = arith.mulf %184, %183 : vector<8x128xf32>
    %cst_42 = arith.constant 5.000000e-01 : f32
    %186 = vector.broadcast %cst_42 : f32 to vector<8x128xf32>
    %187 = arith.addf %185, %186 : vector<8x128xf32>
    %188 = arith.select %16, %183, %187 : vector<8x128xi1>, vector<8x128xf32>
    %189 = vector.extract_strided_slice %188 {offsets = [0, 0], sizes = [8, 32], strides = [1, 1]} : vector<8x128xf32> to vector<8x32xf32>
    %190 = vector.extract_strided_slice %188 {offsets = [0, 32], sizes = [8, 32], strides = [1, 1]} : vector<8x128xf32> to vector<8x32xf32>
    %191 = vector.extract_strided_slice %188 {offsets = [0, 64], sizes = [8, 32], strides = [1, 1]} : vector<8x128xf32> to vector<8x32xf32>
    %192 = vector.extract_strided_slice %188 {offsets = [0, 96], sizes = [8, 32], strides = [1, 1]} : vector<8x128xf32> to vector<8x32xf32>
    %193 = arith.mulf %190, %154 : vector<8x32xf32>
    %194 = arith.mulf %189, %191 : vector<8x32xf32>
    %195 = arith.addf %193, %194 : vector<8x32xf32>
    %196 = math.tanh %195 : vector<8x32xf32>
    %197 = arith.mulf %192, %196 : vector<8x32xf32>
    %c5_i32 = arith.constant 5 : i32
    %198 = tpu.concatenate %197, %182 in 1 : vector<8x32xf32>, vector<8x32xf32> -> vector<8x64xf32>
    %199 = arith.truncf %198 : vector<8x64xf32> to vector<8x64xbf16>
    %cst_43 = arith.constant dense<0.000000e+00> : vector<8x256xf32>
    %200 = tpu.matmul %199, %7, %cst_43 {dimension_numbers = #tpu.dot_dimension_numbers<[1], [0], [0], [1], [0, 0, 1, 1], [], []>} : vector<8x64xbf16>, vector<64x256xbf16>, vector<8x256xf32> -> vector<8x256xf32>
    %c8_i32_44 = arith.constant 8 : i32
    %201 = arith.muli %c5_i32, %c8_i32_44 : i32
    %202 = tpu.assume_multiple %201, 8 : i32
    %203 = arith.index_cast %202 : i32 to index
    %c0_45 = arith.constant 0 : index
    %204 = vector.load %arg8[%203, %c0_45] : memref<64x128xf32, #tpu.memory_space<vmem>>, vector<8x128xf32>
    %205 = vector.extract_strided_slice %200 {offsets = [0, 0], sizes = [8, 128], strides = [1, 1]} : vector<8x256xf32> to vector<8x128xf32>
    %206 = arith.addf %204, %205 : vector<8x128xf32>
    %207 = vector.extract_strided_slice %200 {offsets = [0, 128], sizes = [8, 128], strides = [1, 1]} : vector<8x256xf32> to vector<8x128xf32>
    %208 = arith.addf %207, %10 : vector<8x128xf32>
    %209 = math.tanh %208 : vector<8x128xf32>
    %cst_46 = arith.constant 5.000000e-01 : f32
    %210 = vector.broadcast %cst_46 : f32 to vector<8x128xf32>
    %211 = arith.mulf %210, %209 : vector<8x128xf32>
    %cst_47 = arith.constant 5.000000e-01 : f32
    %212 = vector.broadcast %cst_47 : f32 to vector<8x128xf32>
    %213 = arith.addf %211, %212 : vector<8x128xf32>
    %214 = arith.select %16, %209, %213 : vector<8x128xi1>, vector<8x128xf32>
    %215 = vector.extract_strided_slice %214 {offsets = [0, 0], sizes = [8, 32], strides = [1, 1]} : vector<8x128xf32> to vector<8x32xf32>
    %216 = vector.extract_strided_slice %214 {offsets = [0, 32], sizes = [8, 32], strides = [1, 1]} : vector<8x128xf32> to vector<8x32xf32>
    %217 = vector.extract_strided_slice %214 {offsets = [0, 64], sizes = [8, 32], strides = [1, 1]} : vector<8x128xf32> to vector<8x32xf32>
    %218 = vector.extract_strided_slice %214 {offsets = [0, 96], sizes = [8, 32], strides = [1, 1]} : vector<8x128xf32> to vector<8x32xf32>
    %219 = arith.mulf %216, %180 : vector<8x32xf32>
    %220 = arith.mulf %215, %217 : vector<8x32xf32>
    %221 = arith.addf %219, %220 : vector<8x32xf32>
    %222 = math.tanh %221 : vector<8x32xf32>
    %223 = arith.mulf %218, %222 : vector<8x32xf32>
    %224 = math.tanh %206 : vector<8x128xf32>
    %cst_48 = arith.constant 5.000000e-01 : f32
    %225 = vector.broadcast %cst_48 : f32 to vector<8x128xf32>
    %226 = arith.mulf %225, %224 : vector<8x128xf32>
    %cst_49 = arith.constant 5.000000e-01 : f32
    %227 = vector.broadcast %cst_49 : f32 to vector<8x128xf32>
    %228 = arith.addf %226, %227 : vector<8x128xf32>
    %229 = arith.select %16, %224, %228 : vector<8x128xi1>, vector<8x128xf32>
    %230 = vector.extract_strided_slice %229 {offsets = [0, 0], sizes = [8, 32], strides = [1, 1]} : vector<8x128xf32> to vector<8x32xf32>
    %231 = vector.extract_strided_slice %229 {offsets = [0, 32], sizes = [8, 32], strides = [1, 1]} : vector<8x128xf32> to vector<8x32xf32>
    %232 = vector.extract_strided_slice %229 {offsets = [0, 64], sizes = [8, 32], strides = [1, 1]} : vector<8x128xf32> to vector<8x32xf32>
    %233 = vector.extract_strided_slice %229 {offsets = [0, 96], sizes = [8, 32], strides = [1, 1]} : vector<8x128xf32> to vector<8x32xf32>
    %234 = arith.mulf %231, %195 : vector<8x32xf32>
    %235 = arith.mulf %230, %232 : vector<8x32xf32>
    %236 = arith.addf %234, %235 : vector<8x32xf32>
    %237 = math.tanh %236 : vector<8x32xf32>
    %238 = arith.mulf %233, %237 : vector<8x32xf32>
    %c6_i32 = arith.constant 6 : i32
    %239 = tpu.concatenate %238, %223 in 1 : vector<8x32xf32>, vector<8x32xf32> -> vector<8x64xf32>
    %240 = arith.truncf %239 : vector<8x64xf32> to vector<8x64xbf16>
    %cst_50 = arith.constant dense<0.000000e+00> : vector<8x256xf32>
    %241 = tpu.matmul %240, %7, %cst_50 {dimension_numbers = #tpu.dot_dimension_numbers<[1], [0], [0], [1], [0, 0, 1, 1], [], []>} : vector<8x64xbf16>, vector<64x256xbf16>, vector<8x256xf32> -> vector<8x256xf32>
    %c8_i32_51 = arith.constant 8 : i32
    %242 = arith.muli %c6_i32, %c8_i32_51 : i32
    %243 = tpu.assume_multiple %242, 8 : i32
    %244 = arith.index_cast %243 : i32 to index
    %c0_52 = arith.constant 0 : index
    %245 = vector.load %arg8[%244, %c0_52] : memref<64x128xf32, #tpu.memory_space<vmem>>, vector<8x128xf32>
    %246 = vector.extract_strided_slice %241 {offsets = [0, 0], sizes = [8, 128], strides = [1, 1]} : vector<8x256xf32> to vector<8x128xf32>
    %247 = arith.addf %245, %246 : vector<8x128xf32>
    %248 = vector.extract_strided_slice %241 {offsets = [0, 128], sizes = [8, 128], strides = [1, 1]} : vector<8x256xf32> to vector<8x128xf32>
    %249 = arith.addf %248, %10 : vector<8x128xf32>
    %250 = math.tanh %249 : vector<8x128xf32>
    %cst_53 = arith.constant 5.000000e-01 : f32
    %251 = vector.broadcast %cst_53 : f32 to vector<8x128xf32>
    %252 = arith.mulf %251, %250 : vector<8x128xf32>
    %cst_54 = arith.constant 5.000000e-01 : f32
    %253 = vector.broadcast %cst_54 : f32 to vector<8x128xf32>
    %254 = arith.addf %252, %253 : vector<8x128xf32>
    %255 = arith.select %16, %250, %254 : vector<8x128xi1>, vector<8x128xf32>
    %256 = vector.extract_strided_slice %255 {offsets = [0, 0], sizes = [8, 32], strides = [1, 1]} : vector<8x128xf32> to vector<8x32xf32>
    %257 = vector.extract_strided_slice %255 {offsets = [0, 32], sizes = [8, 32], strides = [1, 1]} : vector<8x128xf32> to vector<8x32xf32>
    %258 = vector.extract_strided_slice %255 {offsets = [0, 64], sizes = [8, 32], strides = [1, 1]} : vector<8x128xf32> to vector<8x32xf32>
    %259 = vector.extract_strided_slice %255 {offsets = [0, 96], sizes = [8, 32], strides = [1, 1]} : vector<8x128xf32> to vector<8x32xf32>
    %260 = arith.mulf %257, %221 : vector<8x32xf32>
    %261 = arith.mulf %256, %258 : vector<8x32xf32>
    %262 = arith.addf %260, %261 : vector<8x32xf32>
    %263 = math.tanh %262 : vector<8x32xf32>
    %264 = arith.mulf %259, %263 : vector<8x32xf32>
    %265 = math.tanh %247 : vector<8x128xf32>
    %cst_55 = arith.constant 5.000000e-01 : f32
    %266 = vector.broadcast %cst_55 : f32 to vector<8x128xf32>
    %267 = arith.mulf %266, %265 : vector<8x128xf32>
    %cst_56 = arith.constant 5.000000e-01 : f32
    %268 = vector.broadcast %cst_56 : f32 to vector<8x128xf32>
    %269 = arith.addf %267, %268 : vector<8x128xf32>
    %270 = arith.select %16, %265, %269 : vector<8x128xi1>, vector<8x128xf32>
    %271 = vector.extract_strided_slice %270 {offsets = [0, 0], sizes = [8, 32], strides = [1, 1]} : vector<8x128xf32> to vector<8x32xf32>
    %272 = vector.extract_strided_slice %270 {offsets = [0, 32], sizes = [8, 32], strides = [1, 1]} : vector<8x128xf32> to vector<8x32xf32>
    %273 = vector.extract_strided_slice %270 {offsets = [0, 64], sizes = [8, 32], strides = [1, 1]} : vector<8x128xf32> to vector<8x32xf32>
    %274 = vector.extract_strided_slice %270 {offsets = [0, 96], sizes = [8, 32], strides = [1, 1]} : vector<8x128xf32> to vector<8x32xf32>
    %275 = arith.mulf %272, %236 : vector<8x32xf32>
    %276 = arith.mulf %271, %273 : vector<8x32xf32>
    %277 = arith.addf %275, %276 : vector<8x32xf32>
    %278 = math.tanh %277 : vector<8x32xf32>
    %279 = arith.mulf %274, %278 : vector<8x32xf32>
    %c7_i32 = arith.constant 7 : i32
    %280 = tpu.concatenate %279, %264 in 1 : vector<8x32xf32>, vector<8x32xf32> -> vector<8x64xf32>
    %281 = arith.truncf %280 : vector<8x64xf32> to vector<8x64xbf16>
    %cst_57 = arith.constant dense<0.000000e+00> : vector<8x256xf32>
    %282 = tpu.matmul %281, %7, %cst_57 {dimension_numbers = #tpu.dot_dimension_numbers<[1], [0], [0], [1], [0, 0, 1, 1], [], []>} : vector<8x64xbf16>, vector<64x256xbf16>, vector<8x256xf32> -> vector<8x256xf32>
    %c8_i32_58 = arith.constant 8 : i32
    %283 = arith.muli %c7_i32, %c8_i32_58 : i32
    %284 = tpu.assume_multiple %283, 8 : i32
    %285 = arith.index_cast %284 : i32 to index
    %c0_59 = arith.constant 0 : index
    %286 = vector.load %arg8[%285, %c0_59] : memref<64x128xf32, #tpu.memory_space<vmem>>, vector<8x128xf32>
    %287 = vector.extract_strided_slice %282 {offsets = [0, 0], sizes = [8, 128], strides = [1, 1]} : vector<8x256xf32> to vector<8x128xf32>
    %288 = arith.addf %286, %287 : vector<8x128xf32>
    %289 = vector.extract_strided_slice %282 {offsets = [0, 128], sizes = [8, 128], strides = [1, 1]} : vector<8x256xf32> to vector<8x128xf32>
    %290 = arith.addf %289, %10 : vector<8x128xf32>
    %291 = math.tanh %290 : vector<8x128xf32>
    %cst_60 = arith.constant 5.000000e-01 : f32
    %292 = vector.broadcast %cst_60 : f32 to vector<8x128xf32>
    %293 = arith.mulf %292, %291 : vector<8x128xf32>
    %cst_61 = arith.constant 5.000000e-01 : f32
    %294 = vector.broadcast %cst_61 : f32 to vector<8x128xf32>
    %295 = arith.addf %293, %294 : vector<8x128xf32>
    %296 = arith.select %16, %291, %295 : vector<8x128xi1>, vector<8x128xf32>
    %297 = vector.extract_strided_slice %296 {offsets = [0, 0], sizes = [8, 32], strides = [1, 1]} : vector<8x128xf32> to vector<8x32xf32>
    %298 = vector.extract_strided_slice %296 {offsets = [0, 32], sizes = [8, 32], strides = [1, 1]} : vector<8x128xf32> to vector<8x32xf32>
    %299 = vector.extract_strided_slice %296 {offsets = [0, 64], sizes = [8, 32], strides = [1, 1]} : vector<8x128xf32> to vector<8x32xf32>
    %300 = vector.extract_strided_slice %296 {offsets = [0, 96], sizes = [8, 32], strides = [1, 1]} : vector<8x128xf32> to vector<8x32xf32>
    %301 = arith.mulf %298, %262 : vector<8x32xf32>
    %302 = arith.mulf %297, %299 : vector<8x32xf32>
    %303 = arith.addf %301, %302 : vector<8x32xf32>
    %304 = math.tanh %303 : vector<8x32xf32>
    %305 = arith.mulf %300, %304 : vector<8x32xf32>
    %306 = math.tanh %288 : vector<8x128xf32>
    %cst_62 = arith.constant 5.000000e-01 : f32
    %307 = vector.broadcast %cst_62 : f32 to vector<8x128xf32>
    %308 = arith.mulf %307, %306 : vector<8x128xf32>
    %cst_63 = arith.constant 5.000000e-01 : f32
    %309 = vector.broadcast %cst_63 : f32 to vector<8x128xf32>
    %310 = arith.addf %308, %309 : vector<8x128xf32>
    %311 = arith.select %16, %306, %310 : vector<8x128xi1>, vector<8x128xf32>
    %312 = vector.extract_strided_slice %311 {offsets = [0, 0], sizes = [8, 32], strides = [1, 1]} : vector<8x128xf32> to vector<8x32xf32>
    %313 = vector.extract_strided_slice %311 {offsets = [0, 32], sizes = [8, 32], strides = [1, 1]} : vector<8x128xf32> to vector<8x32xf32>
    %314 = vector.extract_strided_slice %311 {offsets = [0, 64], sizes = [8, 32], strides = [1, 1]} : vector<8x128xf32> to vector<8x32xf32>
    %315 = vector.extract_strided_slice %311 {offsets = [0, 96], sizes = [8, 32], strides = [1, 1]} : vector<8x128xf32> to vector<8x32xf32>
    %316 = arith.mulf %313, %277 : vector<8x32xf32>
    %317 = arith.mulf %312, %314 : vector<8x32xf32>
    %318 = arith.addf %316, %317 : vector<8x32xf32>
    %319 = math.tanh %318 : vector<8x32xf32>
    %320 = arith.mulf %315, %319 : vector<8x32xf32>
    %c7_i32_64 = arith.constant 7 : i32
    %321 = tpu.concatenate %320, %305 in 1 : vector<8x32xf32>, vector<8x32xf32> -> vector<8x64xf32>
    %322 = arith.truncf %321 : vector<8x64xf32> to vector<8x64xbf16>
    %cst_65 = arith.constant dense<0.000000e+00> : vector<8x256xf32>
    %323 = tpu.matmul %322, %7, %cst_65 {dimension_numbers = #tpu.dot_dimension_numbers<[1], [0], [0], [1], [0, 0, 1, 1], [], []>} : vector<8x64xbf16>, vector<64x256xbf16>, vector<8x256xf32> -> vector<8x256xf32>
    %324 = vector.extract_strided_slice %323 {offsets = [0, 128], sizes = [8, 128], strides = [1, 1]} : vector<8x256xf32> to vector<8x128xf32>
    %325 = arith.addf %324, %10 : vector<8x128xf32>
    %326 = math.tanh %325 : vector<8x128xf32>
    %cst_66 = arith.constant 5.000000e-01 : f32
    %327 = vector.broadcast %cst_66 : f32 to vector<8x128xf32>
    %328 = arith.mulf %327, %326 : vector<8x128xf32>
    %cst_67 = arith.constant 5.000000e-01 : f32
    %329 = vector.broadcast %cst_67 : f32 to vector<8x128xf32>
    %330 = arith.addf %328, %329 : vector<8x128xf32>
    %331 = arith.select %16, %326, %330 : vector<8x128xi1>, vector<8x128xf32>
    %332 = vector.extract_strided_slice %331 {offsets = [0, 0], sizes = [8, 32], strides = [1, 1]} : vector<8x128xf32> to vector<8x32xf32>
    %333 = vector.extract_strided_slice %331 {offsets = [0, 32], sizes = [8, 32], strides = [1, 1]} : vector<8x128xf32> to vector<8x32xf32>
    %334 = vector.extract_strided_slice %331 {offsets = [0, 64], sizes = [8, 32], strides = [1, 1]} : vector<8x128xf32> to vector<8x32xf32>
    %335 = vector.extract_strided_slice %331 {offsets = [0, 96], sizes = [8, 32], strides = [1, 1]} : vector<8x128xf32> to vector<8x32xf32>
    %336 = arith.mulf %333, %303 : vector<8x32xf32>
    %337 = arith.mulf %332, %334 : vector<8x32xf32>
    %338 = arith.addf %336, %337 : vector<8x32xf32>
    %339 = math.tanh %338 : vector<8x32xf32>
    %340 = arith.mulf %335, %339 : vector<8x32xf32>
    %341 = arith.truncf %340 : vector<8x32xf32> to vector<8x32xbf16>
    %c0_68 = arith.constant 0 : index
    %c0_69 = arith.constant 0 : index
    %342 = vector.load %arg5[%c0_68, %c0_69] : memref<32x128xbf16, #tpu.memory_space<vmem>>, vector<32x128xbf16>
    %cst_70 = arith.constant dense<0.000000e+00> : vector<8x128xf32>
    %343 = tpu.matmul %341, %342, %cst_70 {dimension_numbers = #tpu.dot_dimension_numbers<[1], [0], [0], [1], [0, 0, 1, 1], [], []>} : vector<8x32xbf16>, vector<32x128xbf16>, vector<8x128xf32> -> vector<8x128xf32>
    %c0_71 = arith.constant 0 : index
    %c0_72 = arith.constant 0 : index
    %344 = vector.load %arg6[%c0_71, %c0_72] : memref<1x128xf32, #tpu.memory_space<vmem>>, vector<1x128xf32>
    %345 = vector.broadcast %344 : vector<1x128xf32> to vector<8x128xf32>
    %346 = arith.addf %343, %345 : vector<8x128xf32>
    %c0_73 = arith.constant 0 : index
    %c0_74 = arith.constant 0 : index
    %347 = vector.load %arg7[%c0_73, %c0_74] : memref<8x128xf32, #tpu.memory_space<vmem>>, vector<8x128xf32>
    tpu.vector_store %arg7[%c0_73, %c0_74], %346 {strides = array<i32>} : memref<8x128xf32, #tpu.memory_space<vmem>>, vector<8x128xf32>,
    return
  }
}

</mosaic_0001>

<llo_original>
// kernel: tpu_custom_call.1
$region0: #{tpu_custom_call.1}
  #allocation0 [shape = 'u32[]', space=smem, size = 0x4, offset = 0x4, fixed_abs, tag = 'smem constant byte address 0x4 - core index']
  #allocation1 [shape = 'u32[144,128]{1,0:T(1,128)}', space=vmem, size = 0x12000, scoped, tag = 'internal scratch']
  #allocation2 [shape = 'f32[64,128]{1,0:T(8,128)}', space=vmem, size = 0x8000, scoped, tag = 'scratch operand']
  %s0 = inlined_call_operand.vmem [shape: bf16[64,4], index: 0, kind: input, shape index: {}]
  %s1 = inlined_call_operand.vmem [shape: bf16[4,128], index: 1, kind: input, shape index: {}]
  %s2 = inlined_call_operand.vmem [shape: f32[1,128], index: 2, kind: input, shape index: {}]
  %s3 = inlined_call_operand.hbm [shape: bf16[64,256], index: 3, kind: input, shape index: {}]
  %s4 = inlined_call_operand.vmem [shape: f32[1,128], index: 4, kind: input, shape index: {}]
  %s5 = inlined_call_operand.vmem [shape: bf16[32,128], index: 5, kind: input, shape index: {}]
  %s6 = inlined_call_operand.vmem [shape: f32[1,128], index: 6, kind: input, shape index: {}]
  %s7 = inlined_call_operand.hbm [shape: f32[8,128], index: 7, kind: output, shape index: {}]
  %s8 = sld [smem:[#allocation0]]
  $region42: #{tpu_custom_call.1} parent=0
    _
  %s10 = ssub.s32 1, %s8
  %s11 = scalar_select 0, %s10, %s8
  $region1: #{tpu_custom_call.1} parent=0
    #allocation3 [shape = 'u8[32768]{0}', space=vmem, size = 0x8000, scoped, tag = 'input window, operand 3, single buffered']
    #allocation4 [shape = 's32[1]{0}', space=sflag, size = 0x4, scoped, tag = 'scoped memory for tpu_custom_call.1']
    #allocation5 [shape = 's32[1]{0}', space=sflag, size = 0x4, scoped, tag = 'scoped memory for tpu_custom_call.1']
    #allocation6 [shape = 'u8[4096]{0}', space=vmem, size = 0x1000, scoped, tag = 'output window, operand 0, single buffered']
    %12 = vsyncpa [#allocation4], 0
    %13 = vsyncpa [#allocation5], 0
    // Predicated region
    $region2: #{tpu_custom_call.1} parent=1 // pred_check
      _
    $region3: #{tpu_custom_call.1} parent=1 // pred_check_branch
      %15 = sbr.rel (0) target = $region5
    $region4: #{tpu_custom_call.1} parent=1 // pred_region
      _
    $region5: #{tpu_custom_call.1} parent=1 // pred_fallthru
      _
    // Predicated region
    $region6: #{tpu_custom_call.1} parent=1 // pred_check
      _
    $region7: #{tpu_custom_call.1} parent=1 // pred_check_branch
      %17 = sbr.rel (0) target = $region9
    $region8: #{tpu_custom_call.1} parent=1 // pred_region
      _
    $region9: #{tpu_custom_call.1} parent=1 // pred_fallthru
      _
    // Predicated region
    $region10: #{tpu_custom_call.1} parent=1 // pred_check
      _
    $region11: #{tpu_custom_call.1} parent=1 // pred_check_branch
      %19 = sbr.rel (0) target = $region13
    $region12: #{tpu_custom_call.1} parent=1 // pred_region
      _
    $region13: #{tpu_custom_call.1} parent=1 // pred_fallthru
      _
    // Predicated region
    $region14: #{tpu_custom_call.1} parent=1 // pred_check
      _
    $region15: #{tpu_custom_call.1} parent=1 // pred_check_branch
      %21 = sbr.rel (0) target = $region17
    $region16: #{tpu_custom_call.1} parent=1 // pred_region
      %s23 = ssub.s32 1024, 1024
      %24 = vsyncadd [#allocation4], %s23
      %s25 = sshll.u32 [#allocation3], 4
      %s26 = int_to_ptr.vmem [resolvable:$true] %s25
      %31 = dma.hbm_to_vmem [thread:$0]  %s3, 1024, %s26, [#allocation4], 128, 128, 8
    $region17: #{tpu_custom_call.1} parent=1 // pred_fallthru
      _
    // Predicated region
    $region18: #{tpu_custom_call.1} parent=1 // pred_check
      _
    $region19: #{tpu_custom_call.1} parent=1 // pred_check_branch
      %33 = sbr.rel (0) target = $region21
    $region20: #{tpu_custom_call.1} parent=1 // pred_region
      _
    $region21: #{tpu_custom_call.1} parent=1 // pred_fallthru
      _
    // Predicated region
    $region22: #{tpu_custom_call.1} parent=1 // pred_check
      _
    $region23: #{tpu_custom_call.1} parent=1 // pred_check_branch
      %35 = sbr.rel (0) target = $region25
    $region24: #{tpu_custom_call.1} parent=1 // pred_region
      _
    $region25: #{tpu_custom_call.1} parent=1 // pred_fallthru
      _
    // Predicated region
    $region26: #{tpu_custom_call.1} parent=1 // pred_check
      _
    $region27: #{tpu_custom_call.1} parent=1 // pred_check_branch
      %37 = sbr.rel (0) target = $region29
    $region28: #{tpu_custom_call.1} parent=1 // pred_region
      _
    $region29: #{tpu_custom_call.1} parent=1 // pred_fallthru
      _
    // Predicated region
    $region30: #{tpu_custom_call.1} parent=1 // pred_check
      _
    $region31: #{tpu_custom_call.1} parent=1 // pred_check_branch
      %39 = sbr.rel (0) target = $region33
    $region32: #{tpu_custom_call.1} parent=1 // pred_region
      %40 = dma.done [#allocation4], 1024
    $region33: #{tpu_custom_call.1} parent=1 // pred_fallthru
      _
    %v42 = vld [vmem:[%s0] sm:$0xf]
    %v43 = vld [vmem:[%s0 + $0x4] sm:$0xf]
    %v44 = vld [vmem:[%s0 + $0x8] sm:$0xf]
    %v45 = vld [vmem:[%s0 + $0xc] sm:$0xf]
    %v46 = vld [vmem:[%s0 + $0x10] sm:$0xf]
    %v47 = vld [vmem:[%s0 + $0x14] sm:$0xf]
    %v48 = vld [vmem:[%s0 + $0x18] sm:$0xf]
    %v49 = vld [vmem:[%s0 + $0x1c] sm:$0xf]
    %v50 = vld [vmem:[%s1] sm:$0x3]
    %v51 = vld [vmem:[%s2] sm:$0x1]
    %v53 = vlaneseq
    %v54 = vshrl.u32 %v53, 7
    %v55 = vsub.s32 0, %v54
    %v56 = vrot.slane %v51, %v55
    %v66 = vunpack.c.l.b16 %v42
    %v67 = vunpack.c.l.b16 %v43
    %v68 = vunpack.c.l.b16 %v44
    %v69 = vunpack.c.l.b16 %v45
    %v70 = vunpack.c.l.b16 %v46
    %v71 = vunpack.c.l.b16 %v47
    %v72 = vunpack.c.l.b16 %v48
    %v73 = vunpack.c.l.b16 %v49
    %v74 = vpack.c.b16 %v67, %v66
    %v75 = vpack.c.b16 %v69, %v68
    %v76 = vpack.c.b16 %v71, %v70
    %v77 = vpack.c.b16 %v73, %v72
    %vm78 = vcmask 31744
    %v80 = vsel %vm78, %v74, 0
    %v83 = vsel %vm78, %v75, 0
    %v86 = vsel %vm78, %v76, 0
    %v89 = vsel %vm78, %v77, 0
    %vm91 = vcmask 1041408
    %v93 = vsel %vm91, %v50, 0
    %95 = vmatprep.subr.bf16.mxu0 0
    %96 = vmatpush1.bf16.msra.mxu0 %v93
    %97 = vmatprep.subr.bf16.mxu0 0
    %98 = vmatpush1.bf16.msra.mxu0 0
    %99 = vmatprep.subr.bf16.mxu0 0
    %100 = vmatpush1.bf16.msra.mxu0 0
    %101 = vmatprep.subr.bf16.mxu0 0
    %102 = vmatpush1.bf16.msra.mxu0 0
    %103 = vmatprep.subr.bf16.mxu0 0
    %104 = vmatpush1.bf16.msra.mxu0 0
    %105 = vmatprep.subr.bf16.mxu0 0
    %106 = vmatpush1.bf16.msra.mxu0 0
    %107 = vmatprep.subr.bf16.mxu0 0
    %108 = vmatpush1.bf16.msra.mxu0 0
    %109 = vmatprep.subr.bf16.mxu0 0
    %110 = vmatpush1.bf16.msra.mxu0 0
    %111 = vmatprep.subr.bf16.mxu0 0
    %112 = vmatpush1.bf16.msra.mxu0 0
    %113 = vmatprep.subr.bf16.mxu0 0
    %114 = vmatpush1.bf16.msra.mxu0 0
    %115 = vmatprep.subr.bf16.mxu0 0
    %116 = vmatpush1.bf16.msra.mxu0 0
    %117 = vmatprep.subr.bf16.mxu0 0
    %118 = vmatpush1.bf16.msra.mxu0 0
    %119 = vmatprep.subr.bf16.mxu0 0
    %120 = vmatpush1.bf16.msra.mxu0 0
    %121 = vmatprep.subr.bf16.mxu0 0
    %122 = vmatpush1.bf16.msra.mxu0 0
    %123 = vmatprep.subr.bf16.mxu0 0
    %124 = vmatpush1.bf16.msra.mxu0 0
    %125 = vmatprep.subr.bf16.mxu0 0
    %126 = vmatpush1.bf16.msra.mxu0 0
    %127 = vmatprep.mubr.bf16.mxu0 0
    %128 = vmatmul.mubr.bf16.gmra.mrb[0].mxu0 %v80
    %v129 = vpop.f32.mrb[0].mxu0
    %v130 = vadd.f32 %v56, %v129
    %v131 = vpop.f32.mrb[0].mxu0
    %v132 = vpop.f32.mrb[0].mxu0
    %v133 = vadd.f32 %v56, %v132
    %v134 = vpop.f32.mrb[0].mxu0
    %135 = vmatprep.mubr.bf16.mxu0 0
    %136 = vmatmul.mubr.bf16.gmra.mrb[0].mxu0 %v83
    %v137 = vpop.f32.mrb[0].mxu0
    %v138 = vadd.f32 %v56, %v137
    %v139 = vpop.f32.mrb[0].mxu0
    %v140 = vpop.f32.mrb[0].mxu0
    %v141 = vadd.f32 %v56, %v140
    %v142 = vpop.f32.mrb[0].mxu0
    %143 = vmatprep.mubr.bf16.mxu0 0
    %144 = vmatmul.mubr.bf16.gmra.mrb[0].mxu0 %v86
    %v145 = vpop.f32.mrb[0].mxu0
    %v146 = vadd.f32 %v56, %v145
    %v147 = vpop.f32.mrb[0].mxu0
    %v148 = vpop.f32.mrb[0].mxu0
    %v149 = vadd.f32 %v56, %v148
    %v150 = vpop.f32.mrb[0].mxu0
    %151 = vmatprep.mubr.bf16.mxu0 0
    %152 = vmatmul.mubr.bf16.gmra.mrb[0].mxu0 %v89
    %v153 = vpop.f32.mrb[0].mxu0
    %v154 = vadd.f32 %v56, %v153
    %v155 = vpop.f32.mrb[0].mxu0
    %v156 = vpop.f32.mrb[0].mxu0
    %v157 = vadd.f32 %v56, %v156
    %v158 = vpop.f32.mrb[0].mxu0
    %159 = vdwg.mxu0
    %160 = vst [vmem:[#allocation2] sm:$0xff] %v130
    %161 = vst [vmem:[#allocation2 + $0x8] sm:$0xff] %v133
    %162 = vst [vmem:[#allocation2 + $0x10] sm:$0xff] %v138
    %163 = vst [vmem:[#allocation2 + $0x18] sm:$0xff] %v141
    %164 = vst [vmem:[#allocation2 + $0x20] sm:$0xff] %v146
    %165 = vst [vmem:[#allocation2 + $0x28] sm:$0xff] %v149
    %166 = vst [vmem:[#allocation2 + $0x30] sm:$0xff] %v154
    %167 = vst [vmem:[#allocation2 + $0x38] sm:$0xff] %v157
    %v168 = vld [vmem:[#allocation3] sm:$0xff]
    %v169 = vld [vmem:[#allocation3 + $0x8] sm:$0xff]
    %v170 = vld [vmem:[#allocation3 + $0x10] sm:$0xff]
    %v171 = vld [vmem:[#allocation3 + $0x18] sm:$0xff]
    %v172 = vld [vmem:[#allocation3 + $0x20] sm:$0xff]
    %v173 = vld [vmem:[#allocation3 + $0x28] sm:$0xff]
    %v174 = vld [vmem:[#allocation3 + $0x30] sm:$0xff]
    %v175 = vld [vmem:[#allocation3 + $0x38] sm:$0xff]
    %v176 = vld [vmem:[%s4] sm:$0x1]
    %v178 = vlaneseq
    %v179 = vshrl.u32 %v178, 7
    %v180 = vsub.s32 0, %v179
    %v181 = vrot.slane %v176, %v180
    %v183 = vlaneseq
    %v184 = vand.u32 %v183, 127
    %vm185 = vcmp.ge.s32.totalorder %v184, 64
    %vm186 = vcmp.lt.s32.totalorder %v184, 96
    %vm187 = vmand %vm185, %vm186
    %v188 = vld [vmem:[#allocation2] sm:$0xff]
    %v189 = vtanh.pop %v188
    %v190 = vmul.f32 %v189, 0.5
    %v191 = vadd.f32 %v190, 0.5
    %v192 = vsel %vm187, %v189, %v191
    %v193 = vmul.f32 %v192, 0.0
    %195 = vrot.lane.b32.xlu0 %v192, 64
    %v196 = vpop.permute.xlu0 %195
    %v198 = vmul.f32 %v192, %v196
    %200 = vrot.lane.b32.xlu0 %v198, 32
    %v201 = vpop.permute.xlu0 %200
    %v203 = vadd.f32 %v193, %v201
    %v204 = vtanh.pop %v203
    %206 = vrot.lane.b32.xlu0 %v204, 64
    %v207 = vpop.permute.xlu0 %206
    %v209 = vmul.f32 %v192, %v207
    %211 = vrot.lane.b32.xlu0 %v209, 32
    %v212 = vpop.permute.xlu0 %211
    %vm214 = vcmask 261120
    %v215 = vsel %vm214, %v212, 0.0
    %v216 = vpack.c.bf16 %v215, %v215
    %v225 = vunpack.c.l.b16 %v168
    %v226 = vunpack.c.h.b16 %v168
    %v227 = vunpack.c.l.b16 %v169
    %v228 = vunpack.c.h.b16 %v169
    %v229 = vunpack.c.l.b16 %v170
    %v230 = vunpack.c.h.b16 %v170
    %v231 = vunpack.c.l.b16 %v171
    %v232 = vunpack.c.h.b16 %v171
    %v233 = vunpack.c.l.b16 %v172
    %v234 = vunpack.c.h.b16 %v172
    %v235 = vunpack.c.l.b16 %v173
    %v236 = vunpack.c.h.b16 %v173
    %v237 = vunpack.c.l.b16 %v174
    %v238 = vunpack.c.h.b16 %v174
    %v239 = vunpack.c.l.b16 %v175
    %v240 = vunpack.c.h.b16 %v175
    %v241 = vpack.c.b16 %v227, %v225
    %v242 = vpack.c.b16 %v228, %v226
    %v243 = vpack.c.b16 %v231, %v229
    %v244 = vpack.c.b16 %v232, %v230
    %v245 = vpack.c.b16 %v235, %v233
    %v246 = vpack.c.b16 %v236, %v234
    %v247 = vpack.c.b16 %v239, %v237
    %v248 = vpack.c.b16 %v240, %v238
    %vm257 = vcmask 523264
    %v259 = vsel %vm257, %v216, 0
    %261 = vmatprep.subr.bf16.mxu0 %v242
    %262 = vmatpush1.bf16.msra.mxu0 %v241
    %263 = vmatprep.subr.bf16.mxu0 %v244
    %264 = vmatpush1.bf16.msra.mxu0 %v243
    %265 = vmatprep.subr.bf16.mxu0 %v246
    %266 = vmatpush1.bf16.msra.mxu0 %v245
    %267 = vmatprep.subr.bf16.mxu0 %v248
    %268 = vmatpush1.bf16.msra.mxu0 %v247
    %269 = vmatprep.subr.bf16.mxu0 0
    %270 = vmatpush1.bf16.msra.mxu0 0
    %271 = vmatprep.subr.bf16.mxu0 0
    %272 = vmatpush1.bf16.msra.mxu0 0
    %273 = vmatprep.subr.bf16.mxu0 0
    %274 = vmatpush1.bf16.msra.mxu0 0
    %275 = vmatprep.subr.bf16.mxu0 0
    %276 = vmatpush1.bf16.msra.mxu0 0
    %277 = vmatprep.subr.bf16.mxu0 0
    %278 = vmatpush1.bf16.msra.mxu0 0
    %279 = vmatprep.subr.bf16.mxu0 0
    %280 = vmatpush1.bf16.msra.mxu0 0
    %281 = vmatprep.subr.bf16.mxu0 0
    %282 = vmatpush1.bf16.msra.mxu0 0
    %283 = vmatprep.subr.bf16.mxu0 0
    %284 = vmatpush1.bf16.msra.mxu0 0
    %285 = vmatprep.subr.bf16.mxu0 0
    %286 = vmatpush1.bf16.msra.mxu0 0
    %287 = vmatprep.subr.bf16.mxu0 0
    %288 = vmatpush1.bf16.msra.mxu0 0
    %289 = vmatprep.subr.bf16.mxu0 0
    %290 = vmatpush1.bf16.msra.mxu0 0
    %291 = vmatprep.subr.bf16.mxu0 0
    %292 = vmatpush1.bf16.msra.mxu0 0
    %293 = vmatprep.mubr.bf16.mxu0 0
    %294 = vmatmul.mubr.bf16.gmra.mrb[0].mxu0 %v259
    %v295 = vpop.f32.mrb[0].mxu0
    %v296 = vadd.f32 0.0, %v295
    %v297 = vpop.f32.mrb[0].mxu0
    %v298 = vadd.f32 0.0, %v297
    %v299 = vpop.f32.mrb[0].mxu0
    %v300 = vpop.f32.mrb[0].mxu0
    %301 = vdwg.mxu0
    %s302 = scalar_lea.vmem [#allocation2], 8
    %v303 = vld [vmem:[%s302] sm:$0xff]
    %v304 = vadd.f32 %v303, %v296
    %v305 = vadd.f32 %v298, %v181
    %v306 = vtanh.pop %v305
    %v307 = vmul.f32 %v306, 0.5
    %v308 = vadd.f32 %v307, 0.5
    %v309 = vsel %vm187, %v306, %v308
    %v310 = vmul.f32 %v309, 0.0
    %312 = vrot.lane.b32.xlu0 %v309, 64
    %v313 = vpop.permute.xlu0 %312
    %v315 = vmul.f32 %v309, %v313
    %317 = vrot.lane.b32.xlu0 %v315, 32
    %v318 = vpop.permute.xlu0 %317
    %v320 = vadd.f32 %v310, %v318
    %v321 = vtanh.pop %v320
    %323 = vrot.lane.b32.xlu0 %v321, 64
    %v324 = vpop.permute.xlu0 %323
    %v326 = vmul.f32 %v309, %v324
    %v327 = vtanh.pop %v304
    %v328 = vmul.f32 %v327, 0.5
    %v329 = vadd.f32 %v328, 0.5
    %v330 = vsel %vm187, %v327, %v329
    %v331 = vmul.f32 %v330, %v203
    %333 = vrot.lane.b32.xlu0 %v330, 64
    %v334 = vpop.permute.xlu0 %333
    %v336 = vmul.f32 %v330, %v334
    %338 = vrot.lane.b32.xlu0 %v336, 32
    %v339 = vpop.permute.xlu0 %338
    %v341 = vadd.f32 %v331, %v339
    %v342 = vtanh.pop %v341
    %344 = vrot.lane.b32.xlu0 %v342, 64
    %v345 = vpop.permute.xlu0 %344
    %v347 = vmul.f32 %v330, %v345
    %349 = vrot.lane.b32.xlu0 %v347, 32
    %v350 = vpop.permute.xlu0 %349
    %353 = vrot.lane.b32.xlu0 %v326, 64
    %v354 = vpop.permute.xlu0 %353
    %v356 = vsel %vm214, %v350, %v354
    %v357 = vpack.c.bf16 %v356, %v356
    %v359 = vsel %vm257, %v357, 0
    %361 = vmatprep.subr.bf16.mxu0 %v242
    %362 = vmatpush1.bf16.msra.mxu0 %v241
    %363 = vmatprep.subr.bf16.mxu0 %v244
    %364 = vmatpush1.bf16.msra.mxu0 %v243
    %365 = vmatprep.subr.bf16.mxu0 %v246
    %366 = vmatpush1.bf16.msra.mxu0 %v245
    %367 = vmatprep.subr.bf16.mxu0 %v248
    %368 = vmatpush1.bf16.msra.mxu0 %v247
    %369 = vmatprep.subr.bf16.mxu0 0
    %370 = vmatpush1.bf16.msra.mxu0 0
    %371 = vmatprep.subr.bf16.mxu0 0
    %372 = vmatpush1.bf16.msra.mxu0 0
    %373 = vmatprep.subr.bf16.mxu0 0
    %374 = vmatpush1.bf16.msra.mxu0 0
    %375 = vmatprep.subr.bf16.mxu0 0
    %376 = vmatpush1.bf16.msra.mxu0 0
    %377 = vmatprep.subr.bf16.mxu0 0
    %378 = vmatpush1.bf16.msra.mxu0 0
    %379 = vmatprep.subr.bf16.mxu0 0
    %380 = vmatpush1.bf16.msra.mxu0 0
    %381 = vmatprep.subr.bf16.mxu0 0
    %382 = vmatpush1.bf16.msra.mxu0 0
    %383 = vmatprep.subr.bf16.mxu0 0
    %384 = vmatpush1.bf16.msra.mxu0 0
    %385 = vmatprep.subr.bf16.mxu0 0
    %386 = vmatpush1.bf16.msra.mxu0 0
    %387 = vmatprep.subr.bf16.mxu0 0
    %388 = vmatpush1.bf16.msra.mxu0 0
    %389 = vmatprep.subr.bf16.mxu0 0
    %390 = vmatpush1.bf16.msra.mxu0 0
    %391 = vmatprep.subr.bf16.mxu0 0
    %392 = vmatpush1.bf16.msra.mxu0 0
    %393 = vmatprep.mubr.bf16.mxu0 0
    %394 = vmatmul.mubr.bf16.gmra.mrb[0].mxu0 %v359
    %v395 = vpop.f32.mrb[0].mxu0
    %v396 = vadd.f32 0.0, %v395
    %v397 = vpop.f32.mrb[0].mxu0
    %v398 = vadd.f32 0.0, %v397
    %v399 = vpop.f32.mrb[0].mxu0
    %v400 = vpop.f32.mrb[0].mxu0
    %401 = vdwg.mxu0
    %s402 = scalar_lea.vmem [#allocation2], 16
    %v403 = vld [vmem:[%s402] sm:$0xff]
    %v404 = vadd.f32 %v403, %v396
    %v405 = vadd.f32 %v398, %v181
    %v406 = vtanh.pop %v405
    %v407 = vmul.f32 %v406, 0.5
    %v408 = vadd.f32 %v407, 0.5
    %v409 = vsel %vm187, %v406, %v408
    %v410 = vmul.f32 %v409, %v320
    %412 = vrot.lane.b32.xlu0 %v409, 64
    %v413 = vpop.permute.xlu0 %412
    %v415 = vmul.f32 %v409, %v413
    %417 = vrot.lane.b32.xlu0 %v415, 32
    %v418 = vpop.permute.xlu0 %417
    %v420 = vadd.f32 %v410, %v418
    %v421 = vtanh.pop %v420
    %423 = vrot.lane.b32.xlu0 %v421, 64
    %v424 = vpop.permute.xlu0 %423
    %v426 = vmul.f32 %v409, %v424
    %v427 = vtanh.pop %v404
    %v428 = vmul.f32 %v427, 0.5
    %v429 = vadd.f32 %v428, 0.5
    %v430 = vsel %vm187, %v427, %v429
    %v431 = vmul.f32 %v430, %v341
    %433 = vrot.lane.b32.xlu0 %v430, 64
    %v434 = vpop.permute.xlu0 %433
    %v436 = vmul.f32 %v430, %v434
    %438 = vrot.lane.b32.xlu0 %v436, 32
    %v439 = vpop.permute.xlu0 %438
    %v441 = vadd.f32 %v431, %v439
    %v442 = vtanh.pop %v441
    %444 = vrot.lane.b32.xlu0 %v442, 64
    %v445 = vpop.permute.xlu0 %444
    %v447 = vmul.f32 %v430, %v445
    %449 = vrot.lane.b32.xlu0 %v447, 32
    %v450 = vpop.permute.xlu0 %449
    %453 = vrot.lane.b32.xlu0 %v426, 64
    %v454 = vpop.permute.xlu0 %453
    %v456 = vsel %vm214, %v450, %v454
    %v457 = vpack.c.bf16 %v456, %v456
    %v459 = vsel %vm257, %v457, 0
    %461 = vmatprep.subr.bf16.mxu0 %v242
    %462 = vmatpush1.bf16.msra.mxu0 %v241
    %463 = vmatprep.subr.bf16.mxu0 %v244
    %464 = vmatpush1.bf16.msra.mxu0 %v243
    %465 = vmatprep.subr.bf16.mxu0 %v246
    %466 = vmatpush1.bf16.msra.mxu0 %v245
    %467 = vmatprep.subr.bf16.mxu0 %v248
    %468 = vmatpush1.bf16.msra.mxu0 %v247
    %469 = vmatprep.subr.bf16.mxu0 0
    %470 = vmatpush1.bf16.msra.mxu0 0
    %471 = vmatprep.subr.bf16.mxu0 0
    %472 = vmatpush1.bf16.msra.mxu0 0
    %473 = vmatprep.subr.bf16.mxu0 0
    %474 = vmatpush1.bf16.msra.mxu0 0
    %475 = vmatprep.subr.bf16.mxu0 0
    %476 = vmatpush1.bf16.msra.mxu0 0
    %477 = vmatprep.subr.bf16.mxu0 0
    %478 = vmatpush1.bf16.msra.mxu0 0
    %479 = vmatprep.subr.bf16.mxu0 0
    %480 = vmatpush1.bf16.msra.mxu0 0
    %481 = vmatprep.subr.bf16.mxu0 0
    %482 = vmatpush1.bf16.msra.mxu0 0
    %483 = vmatprep.subr.bf16.mxu0 0
    %484 = vmatpush1.bf16.msra.mxu0 0
    %485 = vmatprep.subr.bf16.mxu0 0
    %486 = vmatpush1.bf16.msra.mxu0 0
    %487 = vmatprep.subr.bf16.mxu0 0
    %488 = vmatpush1.bf16.msra.mxu0 0
    %489 = vmatprep.subr.bf16.mxu0 0
    %490 = vmatpush1.bf16.msra.mxu0 0
    %491 = vmatprep.subr.bf16.mxu0 0
    %492 = vmatpush1.bf16.msra.mxu0 0
    %493 = vmatprep.mubr.bf16.mxu0 0
    %494 = vmatmul.mubr.bf16.gmra.mrb[0].mxu0 %v459
    %v495 = vpop.f32.mrb[0].mxu0
    %v496 = vadd.f32 0.0, %v495
    %v497 = vpop.f32.mrb[0].mxu0
    %v498 = vadd.f32 0.0, %v497
    %v499 = vpop.f32.mrb[0].mxu0
    %v500 = vpop.f32.mrb[0].mxu0
    %501 = vdwg.mxu0
    %s502 = scalar_lea.vmem [#allocation2], 24
    %v503 = vld [vmem:[%s502] sm:$0xff]
    %v504 = vadd.f32 %v503, %v496
    %v505 = vadd.f32 %v498, %v181
    %v506 = vtanh.pop %v505
    %v507 = vmul.f32 %v506, 0.5
    %v508 = vadd.f32 %v507, 0.5
    %v509 = vsel %vm187, %v506, %v508
    %v510 = vmul.f32 %v509, %v420
    %512 = vrot.lane.b32.xlu0 %v509, 64
    %v513 = vpop.permute.xlu0 %512
    %v515 = vmul.f32 %v509, %v513
    %517 = vrot.lane.b32.xlu0 %v515, 32
    %v518 = vpop.permute.xlu0 %517
    %v520 = vadd.f32 %v510, %v518
    %v521 = vtanh.pop %v520
    %523 = vrot.lane.b32.xlu0 %v521, 64
    %v524 = vpop.permute.xlu0 %523
    %v526 = vmul.f32 %v509, %v524
    %v527 = vtanh.pop %v504
    %v528 = vmul.f32 %v527, 0.5
    %v529 = vadd.f32 %v528, 0.5
    %v530 = vsel %vm187, %v527, %v529
    %v531 = vmul.f32 %v530, %v441
    %533 = vrot.lane.b32.xlu0 %v530, 64
    %v534 = vpop.permute.xlu0 %533
    %v536 = vmul.f32 %v530, %v534
    %538 = vrot.lane.b32.xlu0 %v536, 32
    %v539 = vpop.permute.xlu0 %538
    %v541 = vadd.f32 %v531, %v539
    %v542 = vtanh.pop %v541
    %544 = vrot.lane.b32.xlu0 %v542, 64
    %v545 = vpop.permute.xlu0 %544
    %v547 = vmul.f32 %v530, %v545
    %549 = vrot.lane.b32.xlu0 %v547, 32
    %v550 = vpop.permute.xlu0 %549
    %553 = vrot.lane.b32.xlu0 %v526, 64
    %v554 = vpop.permute.xlu0 %553
    %v556 = vsel %vm214, %v550, %v554
    %v557 = vpack.c.bf16 %v556, %v556
    %v559 = vsel %vm257, %v557, 0
    %561 = vmatprep.subr.bf16.mxu0 %v242
    %562 = vmatpush1.bf16.msra.mxu0 %v241
    %563 = vmatprep.subr.bf16.mxu0 %v244
    %564 = vmatpush1.bf16.msra.mxu0 %v243
    %565 = vmatprep.subr.bf16.mxu0 %v246
    %566 = vmatpush1.bf16.msra.mxu0 %v245
    %567 = vmatprep.subr.bf16.mxu0 %v248
    %568 = vmatpush1.bf16.msra.mxu0 %v247
    %569 = vmatprep.subr.bf16.mxu0 0
    %570 = vmatpush1.bf16.msra.mxu0 0
    %571 = vmatprep.subr.bf16.mxu0 0
    %572 = vmatpush1.bf16.msra.mxu0 0
    %573 = vmatprep.subr.bf16.mxu0 0
    %574 = vmatpush1.bf16.msra.mxu0 0
    %575 = vmatprep.subr.bf16.mxu0 0
    %576 = vmatpush1.bf16.msra.mxu0 0
    %577 = vmatprep.subr.bf16.mxu0 0
    %578 = vmatpush1.bf16.msra.mxu0 0
    %579 = vmatprep.subr.bf16.mxu0 0
    %580 = vmatpush1.bf16.msra.mxu0 0
    %581 = vmatprep.subr.bf16.mxu0 0
    %582 = vmatpush1.bf16.msra.mxu0 0
    %583 = vmatprep.subr.bf16.mxu0 0
    %584 = vmatpush1.bf16.msra.mxu0 0
    %585 = vmatprep.subr.bf16.mxu0 0
    %586 = vmatpush1.bf16.msra.mxu0 0
    %587 = vmatprep.subr.bf16.mxu0 0
    %588 = vmatpush1.bf16.msra.mxu0 0
    %589 = vmatprep.subr.bf16.mxu0 0
    %590 = vmatpush1.bf16.msra.mxu0 0
    %591 = vmatprep.subr.bf16.mxu0 0
    %592 = vmatpush1.bf16.msra.mxu0 0
    %593 = vmatprep.mubr.bf16.mxu0 0
    %594 = vmatmul.mubr.bf16.gmra.mrb[0].mxu0 %v559
    %v595 = vpop.f32.mrb[0].mxu0
    %v596 = vadd.f32 0.0, %v595
    %v597 = vpop.f32.mrb[0].mxu0
    %v598 = vadd.f32 0.0, %v597
    %v599 = vpop.f32.mrb[0].mxu0
    %v600 = vpop.f32.mrb[0].mxu0
    %601 = vdwg.mxu0
    %s602 = scalar_lea.vmem [#allocation2], 32
    %v603 = vld [vmem:[%s602] sm:$0xff]
    %v604 = vadd.f32 %v603, %v596
    %v605 = vadd.f32 %v598, %v181
    %v606 = vtanh.pop %v605
    %v607 = vmul.f32 %v606, 0.5
    %v608 = vadd.f32 %v607, 0.5
    %v609 = vsel %vm187, %v606, %v608
    %v610 = vmul.f32 %v609, %v520
    %612 = vrot.lane.b32.xlu0 %v609, 64
    %v613 = vpop.permute.xlu0 %612
    %v615 = vmul.f32 %v609, %v613
    %617 = vrot.lane.b32.xlu0 %v615, 32
    %v618 = vpop.permute.xlu0 %617
    %v620 = vadd.f32 %v610, %v618
    %v621 = vtanh.pop %v620
    %623 = vrot.lane.b32.xlu0 %v621, 64
    %v624 = vpop.permute.xlu0 %623
    %v626 = vmul.f32 %v609, %v624
    %v627 = vtanh.pop %v604
    %v628 = vmul.f32 %v627, 0.5
    %v629 = vadd.f32 %v628, 0.5
    %v630 = vsel %vm187, %v627, %v629
    %v631 = vmul.f32 %v630, %v541
    %633 = vrot.lane.b32.xlu0 %v630, 64
    %v634 = vpop.permute.xlu0 %633
    %v636 = vmul.f32 %v630, %v634
    %638 = vrot.lane.b32.xlu0 %v636, 32
    %v639 = vpop.permute.xlu0 %638
    %v641 = vadd.f32 %v631, %v639
    %v642 = vtanh.pop %v641
    %644 = vrot.lane.b32.xlu0 %v642, 64
    %v645 = vpop.permute.xlu0 %644
    %v647 = vmul.f32 %v630, %v645
    %649 = vrot.lane.b32.xlu0 %v647, 32
    %v650 = vpop.permute.xlu0 %649
    %653 = vrot.lane.b32.xlu0 %v626, 64
    %v654 = vpop.permute.xlu0 %653
    %v656 = vsel %vm214, %v650, %v654
    %v657 = vpack.c.bf16 %v656, %v656
    %v659 = vsel %vm257, %v657, 0
    %661 = vmatprep.subr.bf16.mxu0 %v242
    %662 = vmatpush1.bf16.msra.mxu0 %v241
    %663 = vmatprep.subr.bf16.mxu0 %v244
    %664 = vmatpush1.bf16.msra.mxu0 %v243
    %665 = vmatprep.subr.bf16.mxu0 %v246
    %666 = vmatpush1.bf16.msra.mxu0 %v245
    %667 = vmatprep.subr.bf16.mxu0 %v248
    %668 = vmatpush1.bf16.msra.mxu0 %v247
    %669 = vmatprep.subr.bf16.mxu0 0
    %670 = vmatpush1.bf16.msra.mxu0 0
    %671 = vmatprep.subr.bf16.mxu0 0
    %672 = vmatpush1.bf16.msra.mxu0 0
    %673 = vmatprep.subr.bf16.mxu0 0
    %674 = vmatpush1.bf16.msra.mxu0 0
    %675 = vmatprep.subr.bf16.mxu0 0
    %676 = vmatpush1.bf16.msra.mxu0 0
    %677 = vmatprep.subr.bf16.mxu0 0
    %678 = vmatpush1.bf16.msra.mxu0 0
    %679 = vmatprep.subr.bf16.mxu0 0
    %680 = vmatpush1.bf16.msra.mxu0 0
    %681 = vmatprep.subr.bf16.mxu0 0
    %682 = vmatpush1.bf16.msra.mxu0 0
    %683 = vmatprep.subr.bf16.mxu0 0
    %684 = vmatpush1.bf16.msra.mxu0 0
    %685 = vmatprep.subr.bf16.mxu0 0
    %686 = vmatpush1.bf16.msra.mxu0 0
    %687 = vmatprep.subr.bf16.mxu0 0
    %688 = vmatpush1.bf16.msra.mxu0 0
    %689 = vmatprep.subr.bf16.mxu0 0
    %690 = vmatpush1.bf16.msra.mxu0 0
    %691 = vmatprep.subr.bf16.mxu0 0
    %692 = vmatpush1.bf16.msra.mxu0 0
    %693 = vmatprep.mubr.bf16.mxu0 0
    %694 = vmatmul.mubr.bf16.gmra.mrb[0].mxu0 %v659
    %v695 = vpop.f32.mrb[0].mxu0
    %v696 = vadd.f32 0.0, %v695
    %v697 = vpop.f32.mrb[0].mxu0
    %v698 = vadd.f32 0.0, %v697
    %v699 = vpop.f32.mrb[0].mxu0
    %v700 = vpop.f32.mrb[0].mxu0
    %701 = vdwg.mxu0
    %s702 = scalar_lea.vmem [#allocation2], 40
    %v703 = vld [vmem:[%s702] sm:$0xff]
    %v704 = vadd.f32 %v703, %v696
    %v705 = vadd.f32 %v698, %v181
    %v706 = vtanh.pop %v705
    %v707 = vmul.f32 %v706, 0.5
    %v708 = vadd.f32 %v707, 0.5
    %v709 = vsel %vm187, %v706, %v708
    %v710 = vmul.f32 %v709, %v620
    %712 = vrot.lane.b32.xlu0 %v709, 64
    %v713 = vpop.permute.xlu0 %712
    %v715 = vmul.f32 %v709, %v713
    %717 = vrot.lane.b32.xlu0 %v715, 32
    %v718 = vpop.permute.xlu0 %717
    %v720 = vadd.f32 %v710, %v718
    %v721 = vtanh.pop %v720
    %723 = vrot.lane.b32.xlu0 %v721, 64
    %v724 = vpop.permute.xlu0 %723
    %v726 = vmul.f32 %v709, %v724
    %v727 = vtanh.pop %v704
    %v728 = vmul.f32 %v727, 0.5
    %v729 = vadd.f32 %v728, 0.5
    %v730 = vsel %vm187, %v727, %v729
    %v731 = vmul.f32 %v730, %v641
    %733 = vrot.lane.b32.xlu0 %v730, 64
    %v734 = vpop.permute.xlu0 %733
    %v736 = vmul.f32 %v730, %v734
    %738 = vrot.lane.b32.xlu0 %v736, 32
    %v739 = vpop.permute.xlu0 %738
    %v741 = vadd.f32 %v731, %v739
    %v742 = vtanh.pop %v741
    %744 = vrot.lane.b32.xlu0 %v742, 64
    %v745 = vpop.permute.xlu0 %744
    %v747 = vmul.f32 %v730, %v745
    %749 = vrot.lane.b32.xlu0 %v747, 32
    %v750 = vpop.permute.xlu0 %749
    %753 = vrot.lane.b32.xlu0 %v726, 64
    %v754 = vpop.permute.xlu0 %753
    %v756 = vsel %vm214, %v750, %v754
    %v757 = vpack.c.bf16 %v756, %v756
    %v759 = vsel %vm257, %v757, 0
    %761 = vmatprep.subr.bf16.mxu0 %v242
    %762 = vmatpush1.bf16.msra.mxu0 %v241
    %763 = vmatprep.subr.bf16.mxu0 %v244
    %764 = vmatpush1.bf16.msra.mxu0 %v243
    %765 = vmatprep.subr.bf16.mxu0 %v246
    %766 = vmatpush1.bf16.msra.mxu0 %v245
    %767 = vmatprep.subr.bf16.mxu0 %v248
    %768 = vmatpush1.bf16.msra.mxu0 %v247
    %769 = vmatprep.subr.bf16.mxu0 0
    %770 = vmatpush1.bf16.msra.mxu0 0
    %771 = vmatprep.subr.bf16.mxu0 0
    %772 = vmatpush1.bf16.msra.mxu0 0
    %773 = vmatprep.subr.bf16.mxu0 0
    %774 = vmatpush1.bf16.msra.mxu0 0
    %775 = vmatprep.subr.bf16.mxu0 0
    %776 = vmatpush1.bf16.msra.mxu0 0
    %777 = vmatprep.subr.bf16.mxu0 0
    %778 = vmatpush1.bf16.msra.mxu0 0
    %779 = vmatprep.subr.bf16.mxu0 0
    %780 = vmatpush1.bf16.msra.mxu0 0
    %781 = vmatprep.subr.bf16.mxu0 0
    %782 = vmatpush1.bf16.msra.mxu0 0
    %783 = vmatprep.subr.bf16.mxu0 0
    %784 = vmatpush1.bf16.msra.mxu0 0
    %785 = vmatprep.subr.bf16.mxu0 0
    %786 = vmatpush1.bf16.msra.mxu0 0
    %787 = vmatprep.subr.bf16.mxu0 0
    %788 = vmatpush1.bf16.msra.mxu0 0
    %789 = vmatprep.subr.bf16.mxu0 0
    %790 = vmatpush1.bf16.msra.mxu0 0
    %791 = vmatprep.subr.bf16.mxu0 0
    %792 = vmatpush1.bf16.msra.mxu0 0
    %793 = vmatprep.mubr.bf16.mxu0 0
    %794 = vmatmul.mubr.bf16.gmra.mrb[0].mxu0 %v759
    %v795 = vpop.f32.mrb[0].mxu0
    %v796 = vadd.f32 0.0, %v795
    %v797 = vpop.f32.mrb[0].mxu0
    %v798 = vadd.f32 0.0, %v797
    %v799 = vpop.f32.mrb[0].mxu0
    %v800 = vpop.f32.mrb[0].mxu0
    %801 = vdwg.mxu0
    %s802 = scalar_lea.vmem [#allocation2], 48
    %v803 = vld [vmem:[%s802] sm:$0xff]
    %v804 = vadd.f32 %v803, %v796
    %v805 = vadd.f32 %v798, %v181
    %v806 = vtanh.pop %v805
    %v807 = vmul.f32 %v806, 0.5
    %v808 = vadd.f32 %v807, 0.5
    %v809 = vsel %vm187, %v806, %v808
    %v810 = vmul.f32 %v809, %v720
    %812 = vrot.lane.b32.xlu0 %v809, 64
    %v813 = vpop.permute.xlu0 %812
    %v815 = vmul.f32 %v809, %v813
    %817 = vrot.lane.b32.xlu0 %v815, 32
    %v818 = vpop.permute.xlu0 %817
    %v820 = vadd.f32 %v810, %v818
    %v821 = vtanh.pop %v820
    %823 = vrot.lane.b32.xlu0 %v821, 64
    %v824 = vpop.permute.xlu0 %823
    %v826 = vmul.f32 %v809, %v824
    %v827 = vtanh.pop %v804
    %v828 = vmul.f32 %v827, 0.5
    %v829 = vadd.f32 %v828, 0.5
    %v830 = vsel %vm187, %v827, %v829
    %v831 = vmul.f32 %v830, %v741
    %833 = vrot.lane.b32.xlu0 %v830, 64
    %v834 = vpop.permute.xlu0 %833
    %v836 = vmul.f32 %v830, %v834
    %838 = vrot.lane.b32.xlu0 %v836, 32
    %v839 = vpop.permute.xlu0 %838
    %v841 = vadd.f32 %v831, %v839
    %v842 = vtanh.pop %v841
    %844 = vrot.lane.b32.xlu0 %v842, 64
    %v845 = vpop.permute.xlu0 %844
    %v847 = vmul.f32 %v830, %v845
    %849 = vrot.lane.b32.xlu0 %v847, 32
    %v850 = vpop.permute.xlu0 %849
    %853 = vrot.lane.b32.xlu0 %v826, 64
    %v854 = vpop.permute.xlu0 %853
    %v856 = vsel %vm214, %v850, %v854
    %v857 = vpack.c.bf16 %v856, %v856
    %v859 = vsel %vm257, %v857, 0
    %861 = vmatprep.subr.bf16.mxu0 %v242
    %862 = vmatpush1.bf16.msra.mxu0 %v241
    %863 = vmatprep.subr.bf16.mxu0 %v244
    %864 = vmatpush1.bf16.msra.mxu0 %v243
    %865 = vmatprep.subr.bf16.mxu0 %v246
    %866 = vmatpush1.bf16.msra.mxu0 %v245
    %867 = vmatprep.subr.bf16.mxu0 %v248
    %868 = vmatpush1.bf16.msra.mxu0 %v247
    %869 = vmatprep.subr.bf16.mxu0 0
    %870 = vmatpush1.bf16.msra.mxu0 0
    %871 = vmatprep.subr.bf16.mxu0 0
    %872 = vmatpush1.bf16.msra.mxu0 0
    %873 = vmatprep.subr.bf16.mxu0 0
    %874 = vmatpush1.bf16.msra.mxu0 0
    %875 = vmatprep.subr.bf16.mxu0 0
    %876 = vmatpush1.bf16.msra.mxu0 0
    %877 = vmatprep.subr.bf16.mxu0 0
    %878 = vmatpush1.bf16.msra.mxu0 0
    %879 = vmatprep.subr.bf16.mxu0 0
    %880 = vmatpush1.bf16.msra.mxu0 0
    %881 = vmatprep.subr.bf16.mxu0 0
    %882 = vmatpush1.bf16.msra.mxu0 0
    %883 = vmatprep.subr.bf16.mxu0 0
    %884 = vmatpush1.bf16.msra.mxu0 0
    %885 = vmatprep.subr.bf16.mxu0 0
    %886 = vmatpush1.bf16.msra.mxu0 0
    %887 = vmatprep.subr.bf16.mxu0 0
    %888 = vmatpush1.bf16.msra.mxu0 0
    %889 = vmatprep.subr.bf16.mxu0 0
    %890 = vmatpush1.bf16.msra.mxu0 0
    %891 = vmatprep.subr.bf16.mxu0 0
    %892 = vmatpush1.bf16.msra.mxu0 0
    %893 = vmatprep.mubr.bf16.mxu0 0
    %894 = vmatmul.mubr.bf16.gmra.mrb[0].mxu0 %v859
    %v895 = vpop.f32.mrb[0].mxu0
    %v896 = vadd.f32 0.0, %v895
    %v897 = vpop.f32.mrb[0].mxu0
    %v898 = vadd.f32 0.0, %v897
    %v899 = vpop.f32.mrb[0].mxu0
    %v900 = vpop.f32.mrb[0].mxu0
    %901 = vdwg.mxu0
    %s902 = scalar_lea.vmem [#allocation2], 56
    %v903 = vld [vmem:[%s902] sm:$0xff]
    %v904 = vadd.f32 %v903, %v896
    %v905 = vadd.f32 %v898, %v181
    %v906 = vtanh.pop %v905
    %v907 = vmul.f32 %v906, 0.5
    %v908 = vadd.f32 %v907, 0.5
    %v909 = vsel %vm187, %v906, %v908
    %v910 = vmul.f32 %v909, %v820
    %912 = vrot.lane.b32.xlu0 %v909, 64
    %v913 = vpop.permute.xlu0 %912
    %v915 = vmul.f32 %v909, %v913
    %917 = vrot.lane.b32.xlu0 %v915, 32
    %v918 = vpop.permute.xlu0 %917
    %v920 = vadd.f32 %v910, %v918
    %v921 = vtanh.pop %v920
    %923 = vrot.lane.b32.xlu0 %v921, 64
    %v924 = vpop.permute.xlu0 %923
    %v926 = vmul.f32 %v909, %v924
    %v927 = vtanh.pop %v904
    %v928 = vmul.f32 %v927, 0.5
    %v929 = vadd.f32 %v928, 0.5
    %v930 = vsel %vm187, %v927, %v929
    %v931 = vmul.f32 %v930, %v841
    %933 = vrot.lane.b32.xlu0 %v930, 64
    %v934 = vpop.permute.xlu0 %933
    %v936 = vmul.f32 %v930, %v934
    %938 = vrot.lane.b32.xlu0 %v936, 32
    %v939 = vpop.permute.xlu0 %938
    %v941 = vadd.f32 %v931, %v939
    %v942 = vtanh.pop %v941
    %944 = vrot.lane.b32.xlu0 %v942, 64
    %v945 = vpop.permute.xlu0 %944
    %v947 = vmul.f32 %v930, %v945
    %949 = vrot.lane.b32.xlu0 %v947, 32
    %v950 = vpop.permute.xlu0 %949
    %953 = vrot.lane.b32.xlu0 %v926, 64
    %v954 = vpop.permute.xlu0 %953
    %v956 = vsel %vm214, %v950, %v954
    %v957 = vpack.c.bf16 %v956, %v956
    %v959 = vsel %vm257, %v957, 0
    %961 = vmatprep.subr.bf16.mxu0 %v242
    %962 = vmatpush1.bf16.msra.mxu0 %v241
    %963 = vmatprep.subr.bf16.mxu0 %v244
    %964 = vmatpush1.bf16.msra.mxu0 %v243
    %965 = vmatprep.subr.bf16.mxu0 %v246
    %966 = vmatpush1.bf16.msra.mxu0 %v245
    %967 = vmatprep.subr.bf16.mxu0 %v248
    %968 = vmatpush1.bf16.msra.mxu0 %v247
    %969 = vmatprep.subr.bf16.mxu0 0
    %970 = vmatpush1.bf16.msra.mxu0 0
    %971 = vmatprep.subr.bf16.mxu0 0
    %972 = vmatpush1.bf16.msra.mxu0 0
    %973 = vmatprep.subr.bf16.mxu0 0
    %974 = vmatpush1.bf16.msra.mxu0 0
    %975 = vmatprep.subr.bf16.mxu0 0
    %976 = vmatpush1.bf16.msra.mxu0 0
    %977 = vmatprep.subr.bf16.mxu0 0
    %978 = vmatpush1.bf16.msra.mxu0 0
    %979 = vmatprep.subr.bf16.mxu0 0
    %980 = vmatpush1.bf16.msra.mxu0 0
    %981 = vmatprep.subr.bf16.mxu0 0
    %982 = vmatpush1.bf16.msra.mxu0 0
    %983 = vmatprep.subr.bf16.mxu0 0
    %984 = vmatpush1.bf16.msra.mxu0 0
    %985 = vmatprep.subr.bf16.mxu0 0
    %986 = vmatpush1.bf16.msra.mxu0 0
    %987 = vmatprep.subr.bf16.mxu0 0
    %988 = vmatpush1.bf16.msra.mxu0 0
    %989 = vmatprep.subr.bf16.mxu0 0
    %990 = vmatpush1.bf16.msra.mxu0 0
    %991 = vmatprep.subr.bf16.mxu0 0
    %992 = vmatpush1.bf16.msra.mxu0 0
    %993 = vmatprep.mubr.bf16.mxu0 0
    %994 = vmatmul.mubr.bf16.gmra.mrb[0].mxu0 %v959
    %v995 = vpop.f32.mrb[0].mxu0
    %v996 = vpop.f32.mrb[0].mxu0
    %v997 = vadd.f32 0.0, %v996
    %v998 = vpop.f32.mrb[0].mxu0
    %v999 = vpop.f32.mrb[0].mxu0
    %1000 = vdwg.mxu0
    %v1001 = vadd.f32 %v997, %v181
    %v1002 = vtanh.pop %v1001
    %v1003 = vmul.f32 %v1002, 0.5
    %v1004 = vadd.f32 %v1003, 0.5
    %v1005 = vsel %vm187, %v1002, %v1004
    %v1006 = vmul.f32 %v1005, %v920
    %1008 = vrot.lane.b32.xlu0 %v1005, 64
    %v1009 = vpop.permute.xlu0 %1008
    %v1011 = vmul.f32 %v1005, %v1009
    %1013 = vrot.lane.b32.xlu0 %v1011, 32
    %v1014 = vpop.permute.xlu0 %1013
    %v1016 = vadd.f32 %v1006, %v1014
    %v1017 = vtanh.pop %v1016
    %1019 = vrot.lane.b32.xlu0 %v1017, 64
    %v1020 = vpop.permute.xlu0 %1019
    %v1022 = vmul.f32 %v1005, %v1020
    %v1023 = vpack.c.bf16 %v1022, %v1022
    %v1024 = vld [vmem:[%s5] sm:$0xf]
    %v1025 = vld [vmem:[%s5 + $0x4] sm:$0xf]
    %v1026 = vld [vmem:[%s5 + $0x8] sm:$0xf]
    %v1027 = vld [vmem:[%s5 + $0xc] sm:$0xf]
    %v1028 = vld [vmem:[%s6] sm:$0x1]
    %v1030 = vlaneseq
    %v1031 = vshrl.u32 %v1030, 7
    %v1032 = vsub.s32 0, %v1031
    %v1033 = vrot.slane %v1028, %v1032
    %1036 = vrot.lane.b32.xlu0 %v1023, 32
    %v1037 = vpop.permute.xlu0 %1036
    %v1042 = vunpack.c.l.b16 %v1024
    %v1043 = vunpack.c.l.b16 %v1025
    %v1044 = vunpack.c.l.b16 %v1026
    %v1045 = vunpack.c.l.b16 %v1027
    %v1046 = vpack.c.b16 %v1043, %v1042
    %v1047 = vpack.c.b16 %v1045, %v1044
    %v1051 = vsel %vm214, %v1037, 0
    %1053 = vmatprep.subr.bf16.mxu0 0
    %1054 = vmatpush1.bf16.msra.mxu0 %v1046
    %1055 = vmatprep.subr.bf16.mxu0 0
    %1056 = vmatpush1.bf16.msra.mxu0 %v1047
    %1057 = vmatprep.subr.bf16.mxu0 0
    %1058 = vmatpush1.bf16.msra.mxu0 0
    %1059 = vmatprep.subr.bf16.mxu0 0
    %1060 = vmatpush1.bf16.msra.mxu0 0
    %1061 = vmatprep.subr.bf16.mxu0 0
    %1062 = vmatpush1.bf16.msra.mxu0 0
    %1063 = vmatprep.subr.bf16.mxu0 0
    %1064 = vmatpush1.bf16.msra.mxu0 0
    %1065 = vmatprep.subr.bf16.mxu0 0
    %1066 = vmatpush1.bf16.msra.mxu0 0
    %1067 = vmatprep.subr.bf16.mxu0 0
    %1068 = vmatpush1.bf16.msra.mxu0 0
    %1069 = vmatprep.subr.bf16.mxu0 0
    %1070 = vmatpush1.bf16.msra.mxu0 0
    %1071 = vmatprep.subr.bf16.mxu0 0
    %1072 = vmatpush1.bf16.msra.mxu0 0
    %1073 = vmatprep.subr.bf16.mxu0 0
    %1074 = vmatpush1.bf16.msra.mxu0 0
    %1075 = vmatprep.subr.bf16.mxu0 0
    %1076 = vmatpush1.bf16.msra.mxu0 0
    %1077 = vmatprep.subr.bf16.mxu0 0
    %1078 = vmatpush1.bf16.msra.mxu0 0
    %1079 = vmatprep.subr.bf16.mxu0 0
    %1080 = vmatpush1.bf16.msra.mxu0 0
    %1081 = vmatprep.subr.bf16.mxu0 0
    %1082 = vmatpush1.bf16.msra.mxu0 0
    %1083 = vmatprep.subr.bf16.mxu0 0
    %1084 = vmatpush1.bf16.msra.mxu0 0
    %1085 = vmatprep.mubr.bf16.mxu0 0
    %1086 = vmatmul.mubr.bf16.gmra.mrb[0].mxu0 %v1051
    %v1087 = vpop.f32.mrb[0].mxu0
    %v1088 = vadd.f32 %v1033, %v1087
    %v1089 = vpop.f32.mrb[0].mxu0
    %v1090 = vpop.f32.mrb[0].mxu0
    %v1091 = vpop.f32.mrb[0].mxu0
    %1092 = vdwg.mxu0
    %1093 = vst [vmem:[#allocation6] sm:$0xff] %v1088
    // Predicated region
    $region34: #{tpu_custom_call.1} parent=1 // pred_check
      _
    $region35: #{tpu_custom_call.1} parent=1 // pred_check_branch
      %1095 = sbr.rel (0) target = $region37
    $region36: #{tpu_custom_call.1} parent=1 // pred_region
      %s1097 = ssub.s32 128, 128
      %1098 = vsyncadd [#allocation5], %s1097
      %s1100 = sshll.u32 [#allocation6], 4
      %s1101 = int_to_ptr.vmem [resolvable:$true] %s1100
      %1103 = dma.vmem_to_hbm [thread:$0]  %s1101, 128, %s7, [#allocation5]
    $region37: #{tpu_custom_call.1} parent=1 // pred_fallthru
      _
    // Predicated region
    $region38: #{tpu_custom_call.1} parent=1 // pred_check
      _
    $region39: #{tpu_custom_call.1} parent=1 // pred_check_branch
      %1105 = sbr.rel (0) target = $region41
    $region40: #{tpu_custom_call.1} parent=1 // pred_region
      %1106 = dma.done [#allocation5], 128
    $region41: #{tpu_custom_call.1} parent=1 // pred_fallthru
      _
    %1107 = vsyncpa [#allocation4], 1
    %1108 = vsyncpa [#allocation5], 1

</llo_original>
